<compile_context>
chip_gen: v5e
topology: v5e:2x2
jax: 0.10.0
libtpu: 0.0.40
codegen_flags: <defaults>
</compile_context>

<pallas_src>
import functools
import math

import jax
import jax.numpy as jnp
from jax.experimental import pallas as pl
from jax.experimental.pallas import tpu as pltpu

DROPOUT = 0.1            # dropout layers are identity in the forward/inference pass
_MASK_VALUE = -1e30      # large-negative instead of -inf; diagonal is always allowed


def _layernorm(v, w, b, eps=1e-5):
    mu = jnp.mean(v, axis=-1, keepdims=True)
    var = jnp.mean((v - mu) ** 2, axis=-1, keepdims=True)
    return (v - mu) * jax.lax.rsqrt(var + eps) * w + b


def _encoder_kernel(n_heads,
                    x_ref, wqkv_ref, wo_ref, w1_ref, w2_ref, vecs_ref,
                    o_ref,
                    attn_scratch):
    bt, L, E = x_ref.shape
    H = n_heads
    Dh = E // H
    ff = w1_ref.shape[2]
    layer = pl.program_id(1)

    # First layer for this batch tile: seed the VMEM-resident carry.
    @pl.when(layer == 0)
    def _():
        o_ref[...] = x_ref[...]

    # Flattened (B_tile*L, E) carry in f32.
    x = o_ref[...].astype(jnp.float32).reshape(bt * L, E)

    # Packed per-layer vectors: one (8, Kmax) f32 slab; rows sliced statically.
    vecs = vecs_ref[0]
    bqkv = vecs[0:1, :3 * E]
    bo   = vecs[1:2, :E]
    b1   = vecs[2:3, :ff]
    b2   = vecs[3:4, :E]
    ln1w, ln1b = vecs[4:5, :E], vecs[5:6, :E]
    ln2w, ln2b = vecs[6:7, :E], vecs[7:8, :E]

    # ---------------- self-attention block (pre-norm) ----------------
    xn = _layernorm(x, ln1w, ln1b)
    qkv = jnp.dot(xn.astype(jnp.bfloat16), wqkv_ref[0],
                  preferred_element_type=jnp.float32) + bqkv          # (bt*L, 3E) f32
    # 1/sqrt(Dh) is pre-folded into the Q columns of wqkv_t / bqkv.
    q = qkv[:, :E].astype(jnp.bfloat16).reshape(bt, L, E)
    k = qkv[:, E:2 * E].astype(jnp.bfloat16).reshape(bt, L, E)
    v = qkv[:, 2 * E:].astype(jnp.bfloat16).reshape(bt, L, E)

    row = jax.lax.broadcasted_iota(jnp.int32, (L, L), 0)
    col = jax.lax.broadcasted_iota(jnp.int32, (L, L), 1)
    causal = (col > row)[None, :, :]                  # True -> disallowed (triu, k=1)

    # TODO(synk): merge (batch, head) into one dot_general batch dim (or flash-tile)
    # for large H/L; here each head is batched over the batch tile in one einsum.
    for h in range(H):                                # static loop over heads
        qh = q[:, :, h * Dh:(h + 1) * Dh]
        kh = k[:, :, h * Dh:(h + 1) * Dh]
        vh = v[:, :, h * Dh:(h + 1) * Dh]
        s = jnp.einsum('bqd,bkd->bqk', qh, kh,
                       preferred_element_type=jnp.float32)            # (bt, L, L) f32
        s = jnp.where(causal, _MASK_VALUE, s)
        m = jnp.max(s, axis=-1, keepdims=True)
        p = jnp.exp(s - m)
        denom = jnp.sum(p, axis=-1, keepdims=True)
        p = p * pl.reciprocal(denom, approx=True)                     # EUP reciprocal
        attn_scratch[:, :, h * Dh:(h + 1) * Dh] = jnp.einsum(
            'bqk,bkd->bqd', p.astype(jnp.bfloat16), vh,
            preferred_element_type=jnp.float32).astype(jnp.bfloat16)

    attn = jnp.dot(attn_scratch[...].reshape(bt * L, E), wo_ref[0],
                   preferred_element_type=jnp.float32) + bo
    x = x + attn

    # ---------------- feed-forward block (pre-norm) ----------------
    xn2 = _layernorm(x, ln2w, ln2b)
    h1 = jnp.dot(xn2.astype(jnp.bfloat16), w1_ref[0],
                 preferred_element_type=jnp.float32) + b1
    # tanh-GELU runs on the EUP; exact-erf PyTorch GELU differs by ~1e-3.
    h1 = jax.nn.gelu(h1, approximate=True)
    h2 = jnp.dot(h1.astype(jnp.bfloat16), w2_ref[0],
                 preferred_element_type=jnp.float32) + b2
    x = x + h2

    o_ref[...] = x.reshape(bt, L, E).astype(o_ref.dtype)


def _vmem_limit_bytes():
    """~85% of this generation's physical VMEM, with a conservative fallback."""
    try:
        cap = int(pltpu.get_tpu_info().vmem_capacity_bytes)
        return int(min(cap * 0.85, 110 * 1024 * 1024))
    except Exception:
        return 64 * 1024 * 1024


def causal_encoder(x, params, n_heads, batch_tile=None):
    """Pallas forward pass of CausalEncoder.  x: (B, L, E) float32."""
    B, L, E = x.shape
    depth = params["wqkv_t"].shape[0]
    ff = params["w1_t"].shape[2]
    kmax = params["vecs"].shape[2]
    bt = B if batch_tile is None else batch_tile
    assert B % bt == 0

    act_map = lambda b, d: (b, 0, 0)       # activations: per batch tile, carried over d
    w_map = lambda b, d: (d, 0, 0)         # weights: per layer, shared across batch tiles

    in_specs = [
        pl.BlockSpec((bt, L, E), act_map),
        pl.BlockSpec((1, E, 3 * E), w_map),     # wqkv_t (bf16)
        pl.BlockSpec((1, E, E), w_map),         # wo_t   (bf16)
        pl.BlockSpec((1, E, ff), w_map),        # w1_t   (bf16)
        pl.BlockSpec((1, ff, E), w_map),        # w2_t   (bf16)
        pl.BlockSpec((1, 8, kmax), w_map),      # packed biases + LayerNorm params (f32)
    ]

    return pl.pallas_call(
        functools.partial(_encoder_kernel, n_heads),
        out_shape=jax.ShapeDtypeStruct((B, L, E), x.dtype),
        grid=(B // bt, depth),
        in_specs=in_specs,
        out_specs=pl.BlockSpec((bt, L, E), act_map),
        scratch_shapes=[pltpu.VMEM((bt, L, E), jnp.bfloat16)],
        compiler_params=pltpu.CompilerParams(
            dimension_semantics=("parallel", "arbitrary"),
            vmem_limit_bytes=_vmem_limit_bytes()),
    )(x, params["wqkv_t"], params["wo_t"], params["w1_t"], params["w2_t"],
      params["vecs"])


def init_params(key, emb_dim, depth, n_heads, mlp_ratio):
    """Deterministic synthetic parameters matching nn.TransformerEncoderLayer shapes,
    stacked along a leading depth axis.  MXU weights stored in bf16 (pre-transposed
    so the kernel computes x @ W_t + b); the small f32 vectors are packed into one
    (depth, 8, Kmax) slab:  rows = [bqkv, bo, b1, b2, ln1_w, ln1_b, ln2_w, ln2_b]."""
    E = emb_dim
    ff = int(emb_dim * mlp_ratio)
    kmax = max(3 * E, ff)
    scale = 1.0 / math.sqrt(E // n_heads)
    # Fold the 1/sqrt(Dh) query scaling into the Q slice of the in-projection.
    qsel = jnp.concatenate([jnp.full((E,), scale, jnp.float32),
                            jnp.ones((2 * E,), jnp.float32)])

    wqkv_t, wo_t, w1_t, w2_t, vecs = [], [], [], [], []
    for _ in range(depth):
        key, k0, k1, k2, k3, k4, k5, k6, k7 = jax.random.split(key, 9)
        wqkv = jax.random.normal(k0, (3 * E, E), jnp.float32) * 0.02
        bqkv = jax.random.normal(k1, (3 * E,), jnp.float32) * 0.02
        wo = jax.random.normal(k2, (E, E), jnp.float32) * 0.02
        bo = jax.random.normal(k3, (E,), jnp.float32) * 0.02
        w1 = jax.random.normal(k4, (ff, E), jnp.float32) * 0.02
        b1 = jax.random.normal(k5, (ff,), jnp.float32) * 0.02
        w2 = jax.random.normal(k6, (E, ff), jnp.float32) * 0.02
        b2 = jax.random.normal(k7, (E,), jnp.float32) * 0.02

        wqkv_t.append((wqkv.T * qsel[None, :]).astype(jnp.bfloat16))   # (E, 3E)
        wo_t.append(wo.T.astype(jnp.bfloat16))                         # (E, E)
        w1_t.append(w1.T.astype(jnp.bfloat16))                         # (E, ff)
        w2_t.append(w2.T.astype(jnp.bfloat16))                         # (ff, E)

        pad = lambda v: jnp.pad(v, (0, kmax - v.shape[0]))
        rows = [bqkv * qsel, bo, b1, b2,
                jnp.ones((E,), jnp.float32), jnp.zeros((E,), jnp.float32),
                jnp.ones((E,), jnp.float32), jnp.zeros((E,), jnp.float32)]
        vecs.append(jnp.stack([pad(r) for r in rows]))                  # (8, kmax)

    return {
        "wqkv_t": jnp.stack(wqkv_t),
        "wo_t": jnp.stack(wo_t),
        "w1_t": jnp.stack(w1_t),
        "w2_t": jnp.stack(w2_t),
        "vecs": jnp.stack(vecs),
    }


if __name__ == "__main__":
    emb_dim, depth, n_heads, mlp_ratio = 32, 2, 4, 4
    B, L = 2, 8

    key = jax.random.PRNGKey(0)
    kx, kp = jax.random.split(key)
    x = jax.random.normal(kx, (B, L, emb_dim), jnp.float32)
    params = init_params(kp, emb_dim, depth, n_heads, mlp_ratio)

    y = causal_encoder(x, params, n_heads)
    jax.block_until_ready(y)

    assert y.shape == (B, L, emb_dim)
    assert bool(jnp.all(jnp.isfinite(y)))
    print("KERNEL_OK")
</pallas_src>

<mosaic_0001>
module attributes {stable_mosaic.version = 11 : i64} {
  func.func @_encoder_kernel(%arg0: i32, %arg1: i32, %arg2: memref<2x8x32xf32, #tpu.memory_space<vmem>>, %arg3: memref<1x32x96xbf16, #tpu.memory_space<vmem>>, %arg4: memref<1x32x32xbf16, #tpu.memory_space<vmem>>, %arg5: memref<1x32x128xbf16, #tpu.memory_space<vmem>>, %arg6: memref<1x128x32xbf16, #tpu.memory_space<vmem>>, %arg7: memref<1x8x128xf32, #tpu.memory_space<vmem>>, %arg8: memref<2x8x32xf32, #tpu.memory_space<vmem>>, %arg9: memref<2x8x32xbf16, #tpu.memory_space<vmem>>) attributes {dimension_semantics = [#tpu.dimension_semantics<parallel>, #tpu.dimension_semantics<arbitrary>], iteration_bounds = array<i64: 1, 2>, scalar_prefetch = 0 : i64, scratch_operands = 1 : i64, tpu.core_type = #tpu.core_type<tc>, window_params = [{transform_indices = @transform_0, window_bounds = array<i64: 2, 8, 32>}, {transform_indices = @transform_1, window_bounds = array<i64: 1, 32, 96>}, {transform_indices = @transform_2, window_bounds = array<i64: 1, 32, 32>}, {transform_indices = @transform_3, window_bounds = array<i64: 1, 32, 128>}, {transform_indices = @transform_4, window_bounds = array<i64: 1, 128, 32>}, {transform_indices = @transform_5, window_bounds = array<i64: 1, 8, 128>}, {transform_indices = @transform_6, window_bounds = array<i64: 2, 8, 32>}]} {
    %c0_i32 = arith.constant 0 : i32
    %0 = arith.cmpi eq, %arg1, %c0_i32 : i32
    %1 = arith.extui %0 : i1 to i32
    %c0_i32_0 = arith.constant 0 : i32
    %2 = arith.cmpi ne, %1, %c0_i32_0 : i32
    scf.if %2 {
      %c0_70 = arith.constant 0 : index
      %c0_71 = arith.constant 0 : index
      %c0_72 = arith.constant 0 : index
      %202 = vector.load %arg2[%c0_70, %c0_71, %c0_72] : memref<2x8x32xf32, #tpu.memory_space<vmem>>, vector<2x8x32xf32>
      %c0_73 = arith.constant 0 : index
      %c0_74 = arith.constant 0 : index
      %c0_75 = arith.constant 0 : index
      %203 = vector.load %arg8[%c0_73, %c0_74, %c0_75] : memref<2x8x32xf32, #tpu.memory_space<vmem>>, vector<2x8x32xf32>
      tpu.vector_store %arg8[%c0_73, %c0_74, %c0_75], %202 {strides = array<i32>} : memref<2x8x32xf32, #tpu.memory_space<vmem>>, vector<2x8x32xf32>,
    } else {
    }
    %c0 = arith.constant 0 : index
    %c0_1 = arith.constant 0 : index
    %c0_2 = arith.constant 0 : index
    %3 = vector.load %arg8[%c0, %c0_1, %c0_2] : memref<2x8x32xf32, #tpu.memory_space<vmem>>, vector<2x8x32xf32>
    %4 = vector.shape_cast %3 : vector<2x8x32xf32> to vector<16x32xf32>
    %c0_3 = arith.constant 0 : index
    %c0_4 = arith.constant 0 : index
    %c0_5 = arith.constant 0 : index
    %5 = vector.load %arg7[%c0_3, %c0_4, %c0_5] : memref<1x8x128xf32, #tpu.memory_space<vmem>>, vector<1x8x128xf32>
    %6 = vector.shape_cast %5 : vector<1x8x128xf32> to vector<8x128xf32>
    %7 = vector.extract_strided_slice %6 {offsets = [0, 0], sizes = [1, 96], strides = [1, 1]} : vector<8x128xf32> to vector<1x96xf32>
    %8 = vector.extract_strided_slice %6 {offsets = [1, 0], sizes = [1, 32], strides = [1, 1]} : vector<8x128xf32> to vector<1x32xf32>
    %9 = vector.extract_strided_slice %6 {offsets = [2, 0], sizes = [1, 128], strides = [1, 1]} : vector<8x128xf32> to vector<1x128xf32>
    %10 = vector.extract_strided_slice %6 {offsets = [3, 0], sizes = [1, 32], strides = [1, 1]} : vector<8x128xf32> to vector<1x32xf32>
    %11 = vector.extract_strided_slice %6 {offsets = [4, 0], sizes = [1, 32], strides = [1, 1]} : vector<8x128xf32> to vector<1x32xf32>
    %12 = vector.extract_strided_slice %6 {offsets = [5, 0], sizes = [1, 32], strides = [1, 1]} : vector<8x128xf32> to vector<1x32xf32>
    %13 = vector.extract_strided_slice %6 {offsets = [6, 0], sizes = [1, 32], strides = [1, 1]} : vector<8x128xf32> to vector<1x32xf32>
    %14 = vector.extract_strided_slice %6 {offsets = [7, 0], sizes = [1, 32], strides = [1, 1]} : vector<8x128xf32> to vector<1x32xf32>
    %cst = arith.constant dense<0.000000e+00> : vector<16xf32>
    %15 = vector.multi_reduction <add>, %4, %cst [1] : vector<16x32xf32> to vector<16xf32>
    %16 = vector.shape_cast %15 : vector<16xf32> to vector<16x1xf32>
    %cst_6 = arith.constant 3.200000e+01 : f32
    %17 = vector.broadcast %cst_6 : f32 to vector<16x1xf32>
    %18 = arith.divf %16, %17 : vector<16x1xf32>
    %19 = vector.broadcast %18 : vector<16x1xf32> to vector<16x32xf32>
    %20 = arith.subf %4, %19 : vector<16x32xf32>
    %21 = arith.mulf %20, %20 : vector<16x32xf32>
    %cst_7 = arith.constant dense<0.000000e+00> : vector<16xf32>
    %22 = vector.multi_reduction <add>, %21, %cst_7 [1] : vector<16x32xf32> to vector<16xf32>
    %23 = vector.shape_cast %22 : vector<16xf32> to vector<16x1xf32>
    %cst_8 = arith.constant 3.200000e+01 : f32
    %24 = vector.broadcast %cst_8 : f32 to vector<16x1xf32>
    %25 = arith.divf %23, %24 : vector<16x1xf32>
    %26 = vector.broadcast %18 : vector<16x1xf32> to vector<16x32xf32>
    %27 = arith.subf %4, %26 : vector<16x32xf32>
    %cst_9 = arith.constant 9.99999974E-6 : f32
    %28 = vector.broadcast %cst_9 : f32 to vector<16x1xf32>
    %29 = arith.addf %25, %28 : vector<16x1xf32>
    %30 = math.rsqrt %29 : vector<16x1xf32>
    %31 = vector.broadcast %30 : vector<16x1xf32> to vector<16x32xf32>
    %32 = arith.mulf %27, %31 : vector<16x32xf32>
    %33 = vector.broadcast %11 : vector<1x32xf32> to vector<16x32xf32>
    %34 = arith.mulf %32, %33 : vector<16x32xf32>
    %35 = vector.broadcast %12 : vector<1x32xf32> to vector<16x32xf32>
    %36 = arith.addf %34, %35 : vector<16x32xf32>
    %37 = arith.truncf %36 : vector<16x32xf32> to vector<16x32xbf16>
    %c0_10 = arith.constant 0 : index
    %c0_11 = arith.constant 0 : index
    %c0_12 = arith.constant 0 : index
    %38 = vector.load %arg3[%c0_10, %c0_11, %c0_12] : memref<1x32x96xbf16, #tpu.memory_space<vmem>>, vector<1x32x96xbf16>
    %39 = vector.shape_cast %38 : vector<1x32x96xbf16> to vector<32x96xbf16>
    %cst_13 = arith.constant dense<0.000000e+00> : vector<16x96xf32>
    %40 = tpu.matmul %37, %39, %cst_13 {dimension_numbers = #tpu.dot_dimension_numbers<[1], [0], [0], [1], [0, 0, 1, 1], [], []>} : vector<16x32xbf16>, vector<32x96xbf16>, vector<16x96xf32> -> vector<16x96xf32>
    %41 = vector.broadcast %7 : vector<1x96xf32> to vector<16x96xf32>
    %42 = arith.addf %40, %41 : vector<16x96xf32>
    %43 = vector.extract_strided_slice %42 {offsets = [0, 0], sizes = [16, 32], strides = [1, 1]} : vector<16x96xf32> to vector<16x32xf32>
    %44 = arith.truncf %43 : vector<16x32xf32> to vector<16x32xbf16>
    %45 = vector.shape_cast %44 : vector<16x32xbf16> to vector<2x8x32xbf16>
    %46 = vector.extract_strided_slice %42 {offsets = [0, 32], sizes = [16, 32], strides = [1, 1]} : vector<16x96xf32> to vector<16x32xf32>
    %47 = arith.truncf %46 : vector<16x32xf32> to vector<16x32xbf16>
    %48 = vector.shape_cast %47 : vector<16x32xbf16> to vector<2x8x32xbf16>
    %49 = vector.extract_strided_slice %42 {offsets = [0, 64], sizes = [16, 32], strides = [1, 1]} : vector<16x96xf32> to vector<16x32xf32>
    %50 = arith.truncf %49 : vector<16x32xf32> to vector<16x32xbf16>
    %51 = vector.shape_cast %50 : vector<16x32xbf16> to vector<2x8x32xbf16>
    %52 = tpu.iota {dimensions = array<i32: 0>} : vector<8x8xi32>
    %53 = tpu.iota {dimensions = array<i32: 1>} : vector<8x8xi32>
    %54 = arith.cmpi sgt, %53, %52 : vector<8x8xi32>
    %55 = vector.shape_cast %54 : vector<8x8xi1> to vector<1x8x8xi1>
    %56 = vector.extract_strided_slice %45 {offsets = [0, 0, 0], sizes = [2, 8, 8], strides = [1, 1, 1]} : vector<2x8x32xbf16> to vector<2x8x8xbf16>
    %57 = vector.extract_strided_slice %48 {offsets = [0, 0, 0], sizes = [2, 8, 8], strides = [1, 1, 1]} : vector<2x8x32xbf16> to vector<2x8x8xbf16>
    %58 = vector.extract_strided_slice %51 {offsets = [0, 0, 0], sizes = [2, 8, 8], strides = [1, 1, 1]} : vector<2x8x32xbf16> to vector<2x8x8xbf16>
    "tpu.trace_start"() <{level = 10 : i32, message = "bqd,bkd->bqk"}> : () -> ()
    %cst_14 = arith.constant dense<0.000000e+00> : vector<2x8x8xf32>
    %59 = tpu.matmul %56, %57, %cst_14 {dimension_numbers = #tpu.dot_dimension_numbers<[2], [2], [1], [1], [0, 0, 0, 1, 1, 1], [0], [0]>} : vector<2x8x8xbf16>, vector<2x8x8xbf16>, vector<2x8x8xf32> -> vector<2x8x8xf32>
    %cst_15 = arith.constant -1.000000e+30 : f32
    "tpu.trace_stop"() : () -> ()
    %60 = vector.shape_cast %55 : vector<1x8x8xi1> to vector<1x8x8xi1>
    %61 = vector.broadcast %60 : vector<1x8x8xi1> to vector<2x8x8xi1>
    %62 = vector.broadcast %cst_15 : f32 to vector<2x8x8xf32>
    %63 = arith.select %61, %62, %59 : vector<2x8x8xi1>, vector<2x8x8xf32>
    %cst_16 = arith.constant dense<0xFF800000> : vector<2x8xf32>
    %64 = vector.multi_reduction <maximumf>, %63, %cst_16 [2] : vector<2x8x8xf32> to vector<2x8xf32>
    %65 = vector.shape_cast %64 : vector<2x8xf32> to vector<2x8x1xf32>
    %66 = vector.broadcast %65 : vector<2x8x1xf32> to vector<2x8x8xf32>
    %67 = arith.subf %63, %66 : vector<2x8x8xf32>
    %68 = math.exp %67 : vector<2x8x8xf32>
    %cst_17 = arith.constant dense<0.000000e+00> : vector<2x8xf32>
    %69 = vector.multi_reduction <add>, %68, %cst_17 [2] : vector<2x8x8xf32> to vector<2x8xf32>
    %70 = vector.shape_cast %69 : vector<2x8xf32> to vector<2x8x1xf32>
    %71 = tpu.reciprocal %70 {approx = true} : vector<2x8x1xf32> -> vector<2x8x1xf32>
    %72 = vector.broadcast %71 : vector<2x8x1xf32> to vector<2x8x8xf32>
    %73 = arith.mulf %68, %72 : vector<2x8x8xf32>
    %74 = arith.truncf %73 : vector<2x8x8xf32> to vector<2x8x8xbf16>
    "tpu.trace_start"() <{level = 10 : i32, message = "bqk,bkd->bqd"}> : () -> ()
    %cst_18 = arith.constant dense<0.000000e+00> : vector<2x8x8xf32>
    %75 = tpu.matmul %74, %58, %cst_18 {dimension_numbers = #tpu.dot_dimension_numbers<[2], [1], [1], [2], [0, 0, 0, 1, 1, 2], [0], [0]>} : vector<2x8x8xbf16>, vector<2x8x8xbf16>, vector<2x8x8xf32> -> vector<2x8x8xf32>
    "tpu.trace_stop"() : () -> ()
    %76 = arith.truncf %75 : vector<2x8x8xf32> to vector<2x8x8xbf16>
    %c0_19 = arith.constant 0 : index
    %c0_20 = arith.constant 0 : index
    %c0_21 = arith.constant 0 : index
    %77 = vector.load %arg9[%c0_19, %c0_20, %c0_21] : memref<2x8x32xbf16, #tpu.memory_space<vmem>>, vector<2x8x8xbf16>
    tpu.vector_store %arg9[%c0_19, %c0_20, %c0_21], %76 {strides = array<i32>} : memref<2x8x32xbf16, #tpu.memory_space<vmem>>, vector<2x8x8xbf16>,
    %78 = vector.extract_strided_slice %45 {offsets = [0, 0, 8], sizes = [2, 8, 8], strides = [1, 1, 1]} : vector<2x8x32xbf16> to vector<2x8x8xbf16>
    %79 = vector.extract_strided_slice %48 {offsets = [0, 0, 8], sizes = [2, 8, 8], strides = [1, 1, 1]} : vector<2x8x32xbf16> to vector<2x8x8xbf16>
    %80 = vector.extract_strided_slice %51 {offsets = [0, 0, 8], sizes = [2, 8, 8], strides = [1, 1, 1]} : vector<2x8x32xbf16> to vector<2x8x8xbf16>
    "tpu.trace_start"() <{level = 10 : i32, message = "bqd,bkd->bqk"}> : () -> ()
    %cst_22 = arith.constant dense<0.000000e+00> : vector<2x8x8xf32>
    %81 = tpu.matmul %78, %79, %cst_22 {dimension_numbers = #tpu.dot_dimension_numbers<[2], [2], [1], [1], [0, 0, 0, 1, 1, 1], [0], [0]>} : vector<2x8x8xbf16>, vector<2x8x8xbf16>, vector<2x8x8xf32> -> vector<2x8x8xf32>
    %cst_23 = arith.constant -1.000000e+30 : f32
    "tpu.trace_stop"() : () -> ()
    %82 = vector.shape_cast %55 : vector<1x8x8xi1> to vector<1x8x8xi1>
    %83 = vector.broadcast %82 : vector<1x8x8xi1> to vector<2x8x8xi1>
    %84 = vector.broadcast %cst_23 : f32 to vector<2x8x8xf32>
    %85 = arith.select %83, %84, %81 : vector<2x8x8xi1>, vector<2x8x8xf32>
    %cst_24 = arith.constant dense<0xFF800000> : vector<2x8xf32>
    %86 = vector.multi_reduction <maximumf>, %85, %cst_24 [2] : vector<2x8x8xf32> to vector<2x8xf32>
    %87 = vector.shape_cast %86 : vector<2x8xf32> to vector<2x8x1xf32>
    %88 = vector.broadcast %87 : vector<2x8x1xf32> to vector<2x8x8xf32>
    %89 = arith.subf %85, %88 : vector<2x8x8xf32>
    %90 = math.exp %89 : vector<2x8x8xf32>
    %cst_25 = arith.constant dense<0.000000e+00> : vector<2x8xf32>
    %91 = vector.multi_reduction <add>, %90, %cst_25 [2] : vector<2x8x8xf32> to vector<2x8xf32>
    %92 = vector.shape_cast %91 : vector<2x8xf32> to vector<2x8x1xf32>
    %93 = tpu.reciprocal %92 {approx = true} : vector<2x8x1xf32> -> vector<2x8x1xf32>
    %94 = vector.broadcast %93 : vector<2x8x1xf32> to vector<2x8x8xf32>
    %95 = arith.mulf %90, %94 : vector<2x8x8xf32>
    %96 = arith.truncf %95 : vector<2x8x8xf32> to vector<2x8x8xbf16>
    "tpu.trace_start"() <{level = 10 : i32, message = "bqk,bkd->bqd"}> : () -> ()
    %cst_26 = arith.constant dense<0.000000e+00> : vector<2x8x8xf32>
    %97 = tpu.matmul %96, %80, %cst_26 {dimension_numbers = #tpu.dot_dimension_numbers<[2], [1], [1], [2], [0, 0, 0, 1, 1, 2], [0], [0]>} : vector<2x8x8xbf16>, vector<2x8x8xbf16>, vector<2x8x8xf32> -> vector<2x8x8xf32>
    "tpu.trace_stop"() : () -> ()
    %98 = arith.truncf %97 : vector<2x8x8xf32> to vector<2x8x8xbf16>
    %c0_27 = arith.constant 0 : index
    %c0_28 = arith.constant 0 : index
    %c8 = arith.constant 8 : index
    %99 = vector.load %arg9[%c0_27, %c0_28, %c8] : memref<2x8x32xbf16, #tpu.memory_space<vmem>>, vector<2x8x8xbf16>
    tpu.vector_store %arg9[%c0_27, %c0_28, %c8], %98 {strides = array<i32>} : memref<2x8x32xbf16, #tpu.memory_space<vmem>>, vector<2x8x8xbf16>,
    %100 = vector.extract_strided_slice %45 {offsets = [0, 0, 16], sizes = [2, 8, 8], strides = [1, 1, 1]} : vector<2x8x32xbf16> to vector<2x8x8xbf16>
    %101 = vector.extract_strided_slice %48 {offsets = [0, 0, 16], sizes = [2, 8, 8], strides = [1, 1, 1]} : vector<2x8x32xbf16> to vector<2x8x8xbf16>
    %102 = vector.extract_strided_slice %51 {offsets = [0, 0, 16], sizes = [2, 8, 8], strides = [1, 1, 1]} : vector<2x8x32xbf16> to vector<2x8x8xbf16>
    "tpu.trace_start"() <{level = 10 : i32, message = "bqd,bkd->bqk"}> : () -> ()
    %cst_29 = arith.constant dense<0.000000e+00> : vector<2x8x8xf32>
    %103 = tpu.matmul %100, %101, %cst_29 {dimension_numbers = #tpu.dot_dimension_numbers<[2], [2], [1], [1], [0, 0, 0, 1, 1, 1], [0], [0]>} : vector<2x8x8xbf16>, vector<2x8x8xbf16>, vector<2x8x8xf32> -> vector<2x8x8xf32>
    %cst_30 = arith.constant -1.000000e+30 : f32
    "tpu.trace_stop"() : () -> ()
    %104 = vector.shape_cast %55 : vector<1x8x8xi1> to vector<1x8x8xi1>
    %105 = vector.broadcast %104 : vector<1x8x8xi1> to vector<2x8x8xi1>
    %106 = vector.broadcast %cst_30 : f32 to vector<2x8x8xf32>
    %107 = arith.select %105, %106, %103 : vector<2x8x8xi1>, vector<2x8x8xf32>
    %cst_31 = arith.constant dense<0xFF800000> : vector<2x8xf32>
    %108 = vector.multi_reduction <maximumf>, %107, %cst_31 [2] : vector<2x8x8xf32> to vector<2x8xf32>
    %109 = vector.shape_cast %108 : vector<2x8xf32> to vector<2x8x1xf32>
    %110 = vector.broadcast %109 : vector<2x8x1xf32> to vector<2x8x8xf32>
    %111 = arith.subf %107, %110 : vector<2x8x8xf32>
    %112 = math.exp %111 : vector<2x8x8xf32>
    %cst_32 = arith.constant dense<0.000000e+00> : vector<2x8xf32>
    %113 = vector.multi_reduction <add>, %112, %cst_32 [2] : vector<2x8x8xf32> to vector<2x8xf32>
    %114 = vector.shape_cast %113 : vector<2x8xf32> to vector<2x8x1xf32>
    %115 = tpu.reciprocal %114 {approx = true} : vector<2x8x1xf32> -> vector<2x8x1xf32>
    %116 = vector.broadcast %115 : vector<2x8x1xf32> to vector<2x8x8xf32>
    %117 = arith.mulf %112, %116 : vector<2x8x8xf32>
    %118 = arith.truncf %117 : vector<2x8x8xf32> to vector<2x8x8xbf16>
    "tpu.trace_start"() <{level = 10 : i32, message = "bqk,bkd->bqd"}> : () -> ()
    %cst_33 = arith.constant dense<0.000000e+00> : vector<2x8x8xf32>
    %119 = tpu.matmul %118, %102, %cst_33 {dimension_numbers = #tpu.dot_dimension_numbers<[2], [1], [1], [2], [0, 0, 0, 1, 1, 2], [0], [0]>} : vector<2x8x8xbf16>, vector<2x8x8xbf16>, vector<2x8x8xf32> -> vector<2x8x8xf32>
    "tpu.trace_stop"() : () -> ()
    %120 = arith.truncf %119 : vector<2x8x8xf32> to vector<2x8x8xbf16>
    %c0_34 = arith.constant 0 : index
    %c0_35 = arith.constant 0 : index
    %c16 = arith.constant 16 : index
    %121 = vector.load %arg9[%c0_34, %c0_35, %c16] : memref<2x8x32xbf16, #tpu.memory_space<vmem>>, vector<2x8x8xbf16>
    tpu.vector_store %arg9[%c0_34, %c0_35, %c16], %120 {strides = array<i32>} : memref<2x8x32xbf16, #tpu.memory_space<vmem>>, vector<2x8x8xbf16>,
    %122 = vector.extract_strided_slice %45 {offsets = [0, 0, 24], sizes = [2, 8, 8], strides = [1, 1, 1]} : vector<2x8x32xbf16> to vector<2x8x8xbf16>
    %123 = vector.extract_strided_slice %48 {offsets = [0, 0, 24], sizes = [2, 8, 8], strides = [1, 1, 1]} : vector<2x8x32xbf16> to vector<2x8x8xbf16>
    %124 = vector.extract_strided_slice %51 {offsets = [0, 0, 24], sizes = [2, 8, 8], strides = [1, 1, 1]} : vector<2x8x32xbf16> to vector<2x8x8xbf16>
    "tpu.trace_start"() <{level = 10 : i32, message = "bqd,bkd->bqk"}> : () -> ()
    %cst_36 = arith.constant dense<0.000000e+00> : vector<2x8x8xf32>
    %125 = tpu.matmul %122, %123, %cst_36 {dimension_numbers = #tpu.dot_dimension_numbers<[2], [2], [1], [1], [0, 0, 0, 1, 1, 1], [0], [0]>} : vector<2x8x8xbf16>, vector<2x8x8xbf16>, vector<2x8x8xf32> -> vector<2x8x8xf32>
    %cst_37 = arith.constant -1.000000e+30 : f32
    "tpu.trace_stop"() : () -> ()
    %126 = vector.shape_cast %55 : vector<1x8x8xi1> to vector<1x8x8xi1>
    %127 = vector.broadcast %126 : vector<1x8x8xi1> to vector<2x8x8xi1>
    %128 = vector.broadcast %cst_37 : f32 to vector<2x8x8xf32>
    %129 = arith.select %127, %128, %125 : vector<2x8x8xi1>, vector<2x8x8xf32>
    %cst_38 = arith.constant dense<0xFF800000> : vector<2x8xf32>
    %130 = vector.multi_reduction <maximumf>, %129, %cst_38 [2] : vector<2x8x8xf32> to vector<2x8xf32>
    %131 = vector.shape_cast %130 : vector<2x8xf32> to vector<2x8x1xf32>
    %132 = vector.broadcast %131 : vector<2x8x1xf32> to vector<2x8x8xf32>
    %133 = arith.subf %129, %132 : vector<2x8x8xf32>
    %134 = math.exp %133 : vector<2x8x8xf32>
    %cst_39 = arith.constant dense<0.000000e+00> : vector<2x8xf32>
    %135 = vector.multi_reduction <add>, %134, %cst_39 [2] : vector<2x8x8xf32> to vector<2x8xf32>
    %136 = vector.shape_cast %135 : vector<2x8xf32> to vector<2x8x1xf32>
    %137 = tpu.reciprocal %136 {approx = true} : vector<2x8x1xf32> -> vector<2x8x1xf32>
    %138 = vector.broadcast %137 : vector<2x8x1xf32> to vector<2x8x8xf32>
    %139 = arith.mulf %134, %138 : vector<2x8x8xf32>
    %140 = arith.truncf %139 : vector<2x8x8xf32> to vector<2x8x8xbf16>
    "tpu.trace_start"() <{level = 10 : i32, message = "bqk,bkd->bqd"}> : () -> ()
    %cst_40 = arith.constant dense<0.000000e+00> : vector<2x8x8xf32>
    %141 = tpu.matmul %140, %124, %cst_40 {dimension_numbers = #tpu.dot_dimension_numbers<[2], [1], [1], [2], [0, 0, 0, 1, 1, 2], [0], [0]>} : vector<2x8x8xbf16>, vector<2x8x8xbf16>, vector<2x8x8xf32> -> vector<2x8x8xf32>
    "tpu.trace_stop"() : () -> ()
    %142 = arith.truncf %141 : vector<2x8x8xf32> to vector<2x8x8xbf16>
    %c0_41 = arith.constant 0 : index
    %c0_42 = arith.constant 0 : index
    %c24 = arith.constant 24 : index
    %143 = vector.load %arg9[%c0_41, %c0_42, %c24] : memref<2x8x32xbf16, #tpu.memory_space<vmem>>, vector<2x8x8xbf16>
    tpu.vector_store %arg9[%c0_41, %c0_42, %c24], %142 {strides = array<i32>} : memref<2x8x32xbf16, #tpu.memory_space<vmem>>, vector<2x8x8xbf16>,
    %c0_43 = arith.constant 0 : index
    %c0_44 = arith.constant 0 : index
    %c0_45 = arith.constant 0 : index
    %144 = vector.load %arg9[%c0_43, %c0_44, %c0_45] : memref<2x8x32xbf16, #tpu.memory_space<vmem>>, vector<2x8x32xbf16>
    %145 = vector.shape_cast %144 : vector<2x8x32xbf16> to vector<16x32xbf16>
    %c0_46 = arith.constant 0 : index
    %c0_47 = arith.constant 0 : index
    %c0_48 = arith.constant 0 : index
    %146 = vector.load %arg4[%c0_46, %c0_47, %c0_48] : memref<1x32x32xbf16, #tpu.memory_space<vmem>>, vector<1x32x32xbf16>
    %147 = vector.shape_cast %146 : vector<1x32x32xbf16> to vector<32x32xbf16>
    %cst_49 = arith.constant dense<0.000000e+00> : vector<16x32xf32>
    %148 = tpu.matmul %145, %147, %cst_49 {dimension_numbers = #tpu.dot_dimension_numbers<[1], [0], [0], [1], [0, 0, 1, 1], [], []>} : vector<16x32xbf16>, vector<32x32xbf16>, vector<16x32xf32> -> vector<16x32xf32>
    %149 = vector.broadcast %8 : vector<1x32xf32> to vector<16x32xf32>
    %150 = arith.addf %148, %149 : vector<16x32xf32>
    %151 = arith.addf %4, %150 : vector<16x32xf32>
    %cst_50 = arith.constant dense<0.000000e+00> : vector<16xf32>
    %152 = vector.multi_reduction <add>, %151, %cst_50 [1] : vector<16x32xf32> to vector<16xf32>
    %153 = vector.shape_cast %152 : vector<16xf32> to vector<16x1xf32>
    %cst_51 = arith.constant 3.200000e+01 : f32
    %154 = vector.broadcast %cst_51 : f32 to vector<16x1xf32>
    %155 = arith.divf %153, %154 : vector<16x1xf32>
    %156 = vector.broadcast %155 : vector<16x1xf32> to vector<16x32xf32>
    %157 = arith.subf %151, %156 : vector<16x32xf32>
    %158 = arith.mulf %157, %157 : vector<16x32xf32>
    %cst_52 = arith.constant dense<0.000000e+00> : vector<16xf32>
    %159 = vector.multi_reduction <add>, %158, %cst_52 [1] : vector<16x32xf32> to vector<16xf32>
    %160 = vector.shape_cast %159 : vector<16xf32> to vector<16x1xf32>
    %cst_53 = arith.constant 3.200000e+01 : f32
    %161 = vector.broadcast %cst_53 : f32 to vector<16x1xf32>
    %162 = arith.divf %160, %161 : vector<16x1xf32>
    %163 = vector.broadcast %155 : vector<16x1xf32> to vector<16x32xf32>
    %164 = arith.subf %151, %163 : vector<16x32xf32>
    %cst_54 = arith.constant 9.99999974E-6 : f32
    %165 = vector.broadcast %cst_54 : f32 to vector<16x1xf32>
    %166 = arith.addf %162, %165 : vector<16x1xf32>
    %167 = math.rsqrt %166 : vector<16x1xf32>
    %168 = vector.broadcast %167 : vector<16x1xf32> to vector<16x32xf32>
    %169 = arith.mulf %164, %168 : vector<16x32xf32>
    %170 = vector.broadcast %13 : vector<1x32xf32> to vector<16x32xf32>
    %171 = arith.mulf %169, %170 : vector<16x32xf32>
    %172 = vector.broadcast %14 : vector<1x32xf32> to vector<16x32xf32>
    %173 = arith.addf %171, %172 : vector<16x32xf32>
    %174 = arith.truncf %173 : vector<16x32xf32> to vector<16x32xbf16>
    %c0_55 = arith.constant 0 : index
    %c0_56 = arith.constant 0 : index
    %c0_57 = arith.constant 0 : index
    %175 = vector.load %arg5[%c0_55, %c0_56, %c0_57] : memref<1x32x128xbf16, #tpu.memory_space<vmem>>, vector<1x32x128xbf16>
    %176 = vector.shape_cast %175 : vector<1x32x128xbf16> to vector<32x128xbf16>
    %cst_58 = arith.constant dense<0.000000e+00> : vector<16x128xf32>
    %177 = tpu.matmul %174, %176, %cst_58 {dimension_numbers = #tpu.dot_dimension_numbers<[1], [0], [0], [1], [0, 0, 1, 1], [], []>} : vector<16x32xbf16>, vector<32x128xbf16>, vector<16x128xf32> -> vector<16x128xf32>
    %178 = vector.broadcast %9 : vector<1x128xf32> to vector<16x128xf32>
    %179 = arith.addf %177, %178 : vector<16x128xf32>
    %180 = arith.mulf %179, %179 : vector<16x128xf32>
    %181 = arith.mulf %179, %180 : vector<16x128xf32>
    %cst_59 = arith.constant 4.471500e-02 : f32
    %182 = vector.broadcast %cst_59 : f32 to vector<16x128xf32>
    %183 = arith.mulf %182, %181 : vector<16x128xf32>
    %184 = arith.addf %179, %183 : vector<16x128xf32>
    %cst_60 = arith.constant 0.797884583 : f32
    %185 = vector.broadcast %cst_60 : f32 to vector<16x128xf32>
    %186 = arith.mulf %185, %184 : vector<16x128xf32>
    %187 = math.tanh %186 : vector<16x128xf32>
    %cst_61 = arith.constant 1.000000e+00 : f32
    %188 = vector.broadcast %cst_61 : f32 to vector<16x128xf32>
    %189 = arith.addf %188, %187 : vector<16x128xf32>
    %cst_62 = arith.constant 5.000000e-01 : f32
    %190 = vector.broadcast %cst_62 : f32 to vector<16x128xf32>
    %191 = arith.mulf %190, %189 : vector<16x128xf32>
    %192 = arith.mulf %179, %191 : vector<16x128xf32>
    %193 = arith.truncf %192 : vector<16x128xf32> to vector<16x128xbf16>
    %c0_63 = arith.constant 0 : index
    %c0_64 = arith.constant 0 : index
    %c0_65 = arith.constant 0 : index
    %194 = vector.load %arg6[%c0_63, %c0_64, %c0_65] : memref<1x128x32xbf16, #tpu.memory_space<vmem>>, vector<1x128x32xbf16>
    %195 = vector.shape_cast %194 : vector<1x128x32xbf16> to vector<128x32xbf16>
    %cst_66 = arith.constant dense<0.000000e+00> : vector<16x32xf32>
    %196 = tpu.matmul %193, %195, %cst_66 {dimension_numbers = #tpu.dot_dimension_numbers<[1], [0], [0], [1], [0, 0, 1, 1], [], []>} : vector<16x128xbf16>, vector<128x32xbf16>, vector<16x32xf32> -> vector<16x32xf32>
    %197 = vector.broadcast %10 : vector<1x32xf32> to vector<16x32xf32>
    %198 = arith.addf %196, %197 : vector<16x32xf32>
    %199 = arith.addf %151, %198 : vector<16x32xf32>
    %200 = vector.shape_cast %199 : vector<16x32xf32> to vector<2x8x32xf32>
    %c0_67 = arith.constant 0 : index
    %c0_68 = arith.constant 0 : index
    %c0_69 = arith.constant 0 : index
    %201 = vector.load %arg8[%c0_67, %c0_68, %c0_69] : memref<2x8x32xf32, #tpu.memory_space<vmem>>, vector<2x8x32xf32>
    tpu.vector_store %arg8[%c0_67, %c0_68, %c0_69], %200 {strides = array<i32>} : memref<2x8x32xf32, #tpu.memory_space<vmem>>, vector<2x8x32xf32>,
    return
  }
  func.func @transform_0(%arg0: i32, %arg1: i32) -> (i32, i32, i32) {
    %c0_i32 = arith.constant 0 : i32
    %c0_i32_0 = arith.constant 0 : i32
    %c0_i32_1 = arith.constant 0 : i32
    return %arg0, %c0_i32, %c0_i32_0 : i32, i32, i32
  }
  func.func @transform_1(%arg0: i32, %arg1: i32) -> (i32, i32, i32) {
    %c0_i32 = arith.constant 0 : i32
    %c0_i32_0 = arith.constant 0 : i32
    %c0_i32_1 = arith.constant 0 : i32
    return %arg1, %c0_i32, %c0_i32_0 : i32, i32, i32
  }
  func.func @transform_2(%arg0: i32, %arg1: i32) -> (i32, i32, i32) {
    %c0_i32 = arith.constant 0 : i32
    %c0_i32_0 = arith.constant 0 : i32
    %c0_i32_1 = arith.constant 0 : i32
    return %arg1, %c0_i32, %c0_i32_0 : i32, i32, i32
  }
  func.func @transform_3(%arg0: i32, %arg1: i32) -> (i32, i32, i32) {
    %c0_i32 = arith.constant 0 : i32
    %c0_i32_0 = arith.constant 0 : i32
    %c0_i32_1 = arith.constant 0 : i32
    return %arg1, %c0_i32, %c0_i32_0 : i32, i32, i32
  }
  func.func @transform_4(%arg0: i32, %arg1: i32) -> (i32, i32, i32) {
    %c0_i32 = arith.constant 0 : i32
    %c0_i32_0 = arith.constant 0 : i32
    %c0_i32_1 = arith.constant 0 : i32
    return %arg1, %c0_i32, %c0_i32_0 : i32, i32, i32
  }
  func.func @transform_5(%arg0: i32, %arg1: i32) -> (i32, i32, i32) {
    %c0_i32 = arith.constant 0 : i32
    %c0_i32_0 = arith.constant 0 : i32
    %c0_i32_1 = arith.constant 0 : i32
    return %arg1, %c0_i32, %c0_i32_0 : i32, i32, i32
  }
  func.func @transform_6(%arg0: i32, %arg1: i32) -> (i32, i32, i32) {
    %c0_i32 = arith.constant 0 : i32
    %c0_i32_0 = arith.constant 0 : i32
    %c0_i32_1 = arith.constant 0 : i32
    return %arg0, %c0_i32, %c0_i32_0 : i32, i32, i32
  }
}

</mosaic_0001>

<llo_original>
// kernel: tpu_custom_call.1
$region0: #{tpu_custom_call.1}
  #allocation0 [shape = 'u32[]', space=smem, size = 0x4, offset = 0x4, fixed_abs, tag = 'smem constant byte address 0x4 - core index']
  #allocation1 [shape = 'u32[72,128]{1,0:T(1,128)}', space=vmem, size = 0x9000, scoped, tag = 'internal scratch']
  #allocation2 [shape = 'bf16[2,8,32]{2,1,0:T(8,128)(2,1)}', space=vmem, size = 0x1000, scoped, tag = 'scratch operand']
  %s0 = inlined_call_operand.vmem [shape: f32[2,8,32], index: 0, kind: input, shape index: {}]
  %s1 = inlined_call_operand.vmem [shape: bf16[2,32,96], index: 1, kind: input, shape index: {}]
  %s2 = inlined_call_operand.vmem [shape: bf16[2,32,32], index: 2, kind: input, shape index: {}]
  %s3 = inlined_call_operand.vmem [shape: bf16[2,32,128], index: 3, kind: input, shape index: {}]
  %s4 = inlined_call_operand.vmem [shape: bf16[2,128,32], index: 4, kind: input, shape index: {}]
  %s5 = inlined_call_operand.vmem [shape: f32[2,8,128], index: 5, kind: input, shape index: {}]
  %s6 = inlined_call_operand.hbm [shape: f32[2,8,32], index: 6, kind: output, shape index: {}]
  %s7 = sld [smem:[#allocation0]]
  $region61: #{tpu_custom_call.1} parent=0
    _
  %s9 = ssub.s32 1, %s7
  %s10 = scalar_select 0, %s9, %s7
  $region1: #{tpu_custom_call.1} parent=0
    #allocation3 [shape = 'u8[8192]{0}', space=vmem, size = 0x2000, scoped, tag = 'output window, operand 0, single buffered']
    #allocation4 [shape = 's32[2]{0}', space=sflag, size = 0x8, scoped, tag = 'scoped memory for tpu_custom_call.1']
    %11 = vsyncpa [#allocation4], 0
    loop: start=0, step=1, limit=4
    $region2: #{tpu_custom_call.1} parent=1 // loop_pre_header
      _
    $region3: #{tpu_custom_call.1} parent=1 // loop_header
      %s13 = sphi 0, %s17
      %p14 = scmp.ge.s32.totalorder %s13, 4
      %s20 = sphi 0, %s32
      %s21 = sphi 0, %s28
      %s22 = sphi 0, %s20
      %s23 = sphi 0, %s21
      %s24 = sphi 0, %s22
      %s25 = sphi 0, %s23
      %s35 = sphi 0, %s37
      %s38 = sphi 0, %s35
      %s39 = sphi 0, %s38
      %s55 = sphi 0, %s39
      %s61 = sphi 0, %s63
      %s64 = sphi 0, %s61
      %s65 = sphi 0, %s64
      %s81 = sphi 0, %s65
      %s87 = sphi 0, %s89
      %s90 = sphi 0, %s87
      %s91 = sphi 0, %s90
      %s107 = sphi 0, %s91
      %s113 = sphi 0, %s115
      %s116 = sphi 0, %s113
      %s117 = sphi 0, %s116
      %s133 = sphi 0, %s117
      %s139 = sphi 0, %s141
      %s142 = sphi 0, %s139
      %s143 = sphi 0, %s142
      %s159 = sphi 0, %s143
      %s165 = sphi 0, %s167
      %s168 = sphi 0, %s165
      %s169 = sphi 0, %s168
      %s185 = sphi 0, %s169
      %s191 = sphi 0, %s193
      %s194 = sphi 0, %s191
      %s195 = sphi 0, %s194
      %s211 = sphi 0, %s195
    $region4: #{tpu_custom_call.1} parent=1 // loop_header_branch
      %16 = sbr.rel (%p14) target = $region8
    $region5: #{tpu_custom_call.1} parent=1 // loop_body
      %s18 = ssub.s32 %s13, 1
      %s19 = ssub.s32 %s13, 2
      %s26 = sadd.s32 1, %s21
      %p27 = scmp.ge.s32.totalorder %s26, 2
      %s28 = scalar_select %p27, 0, %s26
      %s29 = sadd.s32 1, %s20
      %s30 = scalar_select %p27, %s29, %s20
      %p31 = scmp.ge.s32.totalorder %s30, 1
      %s32 = scalar_select %p31, 0, %s30
      %s33 = ssub.s32 %s20, %s32
      %p34 = scmp.eq.s32.totalorder %s33, 0
      %s36 = sadd.s32 %s35, 1
      %s37 = scalar_select %p34, %s35, %s36
      %p40 = pneg %p34
      %p41 = scmp.eq.s32.totalorder %s13, 1
      %p42 = por %p40, %p41
      %p43 = scmp.ne.s32.totalorder %s35, %s38
      %p44 = scmp.eq.s32.totalorder %s13, 0
      %p45 = por %p43, %p44
      %p46 = scmp.ne.s32.totalorder %s35, %s38
      %p47 = scmp.eq.s32.totalorder %s18, 1
      %p48 = por %p46, %p47
      %p49 = scmp.ne.s32.totalorder %s38, %s39
      %p50 = scmp.eq.s32.totalorder %s18, 0
      %p51 = por %p49, %p50
      %p52 = scmp.ne.s32.totalorder %s38, %s39
      %p53 = scmp.eq.s32.totalorder %s19, 1
      %p54 = por %p52, %p53
      %p56 = scmp.ne.s32.totalorder %s39, %s55
      %p57 = scmp.eq.s32.totalorder %s19, 0
      %p58 = por %p56, %p57
      %s59 = ssub.s32 %s21, %s28
      %p60 = scmp.eq.s32.totalorder %s59, 0
      %s62 = sadd.s32 %s61, 1
      %s63 = scalar_select %p60, %s61, %s62
      %p66 = pneg %p60
      %p67 = scmp.eq.s32.totalorder %s13, 1
      %p68 = por %p66, %p67
      %p69 = scmp.ne.s32.totalorder %s61, %s64
      %p70 = scmp.eq.s32.totalorder %s13, 0
      %p71 = por %p69, %p70
      %p72 = scmp.ne.s32.totalorder %s61, %s64
      %p73 = scmp.eq.s32.totalorder %s18, 1
      %p74 = por %p72, %p73
      %p75 = scmp.ne.s32.totalorder %s64, %s65
      %p76 = scmp.eq.s32.totalorder %s18, 0
      %p77 = por %p75, %p76
      %p78 = scmp.ne.s32.totalorder %s64, %s65
      %p79 = scmp.eq.s32.totalorder %s19, 1
      %p80 = por %p78, %p79
      %p82 = scmp.ne.s32.totalorder %s65, %s81
      %p83 = scmp.eq.s32.totalorder %s19, 0
      %p84 = por %p82, %p83
      %s85 = ssub.s32 %s21, %s28
      %p86 = scmp.eq.s32.totalorder %s85, 0
      %s88 = sadd.s32 %s87, 1
      %s89 = scalar_select %p86, %s87, %s88
      %p92 = pneg %p86
      %p93 = scmp.eq.s32.totalorder %s13, 1
      %p94 = por %p92, %p93
      %p95 = scmp.ne.s32.totalorder %s87, %s90
      %p96 = scmp.eq.s32.totalorder %s13, 0
      %p97 = por %p95, %p96
      %p98 = scmp.ne.s32.totalorder %s87, %s90
      %p99 = scmp.eq.s32.totalorder %s18, 1
      %p100 = por %p98, %p99
      %p101 = scmp.ne.s32.totalorder %s90, %s91
      %p102 = scmp.eq.s32.totalorder %s18, 0
      %p103 = por %p101, %p102
      %p104 = scmp.ne.s32.totalorder %s90, %s91
      %p105 = scmp.eq.s32.totalorder %s19, 1
      %p106 = por %p104, %p105
      %p108 = scmp.ne.s32.totalorder %s91, %s107
      %p109 = scmp.eq.s32.totalorder %s19, 0
      %p110 = por %p108, %p109
      %s111 = ssub.s32 %s21, %s28
      %p112 = scmp.eq.s32.totalorder %s111, 0
      %s114 = sadd.s32 %s113, 1
      %s115 = scalar_select %p112, %s113, %s114
      %p118 = pneg %p112
      %p119 = scmp.eq.s32.totalorder %s13, 1
      %p120 = por %p118, %p119
      %p121 = scmp.ne.s32.totalorder %s113, %s116
      %p122 = scmp.eq.s32.totalorder %s13, 0
      %p123 = por %p121, %p122
      %p124 = scmp.ne.s32.totalorder %s113, %s116
      %p125 = scmp.eq.s32.totalorder %s18, 1
      %p126 = por %p124, %p125
      %p127 = scmp.ne.s32.totalorder %s116, %s117
      %p128 = scmp.eq.s32.totalorder %s18, 0
      %p129 = por %p127, %p128
      %p130 = scmp.ne.s32.totalorder %s116, %s117
      %p131 = scmp.eq.s32.totalorder %s19, 1
      %p132 = por %p130, %p131
      %p134 = scmp.ne.s32.totalorder %s117, %s133
      %p135 = scmp.eq.s32.totalorder %s19, 0
      %p136 = por %p134, %p135
      %s137 = ssub.s32 %s21, %s28
      %p138 = scmp.eq.s32.totalorder %s137, 0
      %s140 = sadd.s32 %s139, 1
      %s141 = scalar_select %p138, %s139, %s140
      %p144 = pneg %p138
      %p145 = scmp.eq.s32.totalorder %s13, 1
      %p146 = por %p144, %p145
      %p147 = scmp.ne.s32.totalorder %s139, %s142
      %p148 = scmp.eq.s32.totalorder %s13, 0
      %p149 = por %p147, %p148
      %p150 = scmp.ne.s32.totalorder %s139, %s142
      %p151 = scmp.eq.s32.totalorder %s18, 1
      %p152 = por %p150, %p151
      %p153 = scmp.ne.s32.totalorder %s142, %s143
      %p154 = scmp.eq.s32.totalorder %s18, 0
      %p155 = por %p153, %p154
      %p156 = scmp.ne.s32.totalorder %s142, %s143
      %p157 = scmp.eq.s32.totalorder %s19, 1
      %p158 = por %p156, %p157
      %p160 = scmp.ne.s32.totalorder %s143, %s159
      %p161 = scmp.eq.s32.totalorder %s19, 0
      %p162 = por %p160, %p161
      %s163 = ssub.s32 %s21, %s28
      %p164 = scmp.eq.s32.totalorder %s163, 0
      %s166 = sadd.s32 %s165, 1
      %s167 = scalar_select %p164, %s165, %s166
      %p170 = pneg %p164
      %p171 = scmp.eq.s32.totalorder %s13, 1
      %p172 = por %p170, %p171
      %p173 = scmp.ne.s32.totalorder %s165, %s168
      %p174 = scmp.eq.s32.totalorder %s13, 0
      %p175 = por %p173, %p174
      %p176 = scmp.ne.s32.totalorder %s165, %s168
      %p177 = scmp.eq.s32.totalorder %s18, 1
      %p178 = por %p176, %p177
      %p179 = scmp.ne.s32.totalorder %s168, %s169
      %p180 = scmp.eq.s32.totalorder %s18, 0
      %p181 = por %p179, %p180
      %p182 = scmp.ne.s32.totalorder %s168, %s169
      %p183 = scmp.eq.s32.totalorder %s19, 1
      %p184 = por %p182, %p183
      %p186 = scmp.ne.s32.totalorder %s169, %s185
      %p187 = scmp.eq.s32.totalorder %s19, 0
      %p188 = por %p186, %p187
      %s189 = ssub.s32 %s20, %s32
      %p190 = scmp.eq.s32.totalorder %s189, 0
      %s192 = sadd.s32 %s191, 1
      %s193 = scalar_select %p190, %s191, %s192
      %p196 = pneg %p190
      %p197 = scmp.eq.s32.totalorder %s13, 1
      %p198 = por %p196, %p197
      %p199 = scmp.ne.s32.totalorder %s191, %s194
      %p200 = scmp.eq.s32.totalorder %s13, 0
      %p201 = por %p199, %p200
      %p202 = scmp.ne.s32.totalorder %s191, %s194
      %p203 = scmp.eq.s32.totalorder %s18, 1
      %p204 = por %p202, %p203
      %p205 = scmp.ne.s32.totalorder %s194, %s195
      %p206 = scmp.eq.s32.totalorder %s18, 0
      %p207 = por %p205, %p206
      %p208 = scmp.ne.s32.totalorder %s194, %s195
      %p209 = scmp.eq.s32.totalorder %s19, 1
      %p210 = por %p208, %p209
      %p212 = scmp.ne.s32.totalorder %s195, %s211
      %p213 = scmp.eq.s32.totalorder %s19, 0
      %p214 = por %p212, %p213
      %p215 = scmp.le.s32.totalorder 1, %s13
      %p216 = scmp.lt.s32.totalorder %s13, 3
      %p217 = pnand %p215, %p216
      %p218 = pneg %p217
      // Predicated region
      $region9: #{tpu_custom_call.1} parent=5 // pred_check
        _
      $region10: #{tpu_custom_call.1} parent=5 // pred_check_branch
        %220 = sbr.rel (%p217) target = $region12
      $region11: #{tpu_custom_call.1} parent=5 // pred_region
        %s221 = ssub.s32 %s13, 1
        // Predicated region
        $region13: #{tpu_custom_call.1} parent=11 // pred_check
          %p222 = pneg %p51
        $region14: #{tpu_custom_call.1} parent=11 // pred_check_branch
          %224 = sbr.rel (%p222) target = $region16
        $region15: #{tpu_custom_call.1} parent=11 // pred_region
          %s225 = smul.u32 2, %s22
          %p226 = scmp.lt.s32.totalorder %s225, 1
          %s227 = scalar_select %p226, %s225, 1
          %s228 = smul.addr %s227, 8
          %s229 = scalar_lea.vmem %s0, %s228
          %s230 = smul.u32 2, %s22
        $region16: #{tpu_custom_call.1} parent=11 // pred_fallthru
          _
      $region12: #{tpu_custom_call.1} parent=5 // pred_fallthru
        _
      %p231 = scmp.lt.s32.totalorder %s13, 2
      // Predicated region
      $region17: #{tpu_custom_call.1} parent=5 // pred_check
        %p232 = pneg %p231
      $region18: #{tpu_custom_call.1} parent=5 // pred_check_branch
        %234 = sbr.rel (%p232) target = $region20
      $region19: #{tpu_custom_call.1} parent=5 // pred_region
        // Predicated region
        $region21: #{tpu_custom_call.1} parent=19 // pred_check
          %p235 = pneg %p71
        $region22: #{tpu_custom_call.1} parent=19 // pred_check_branch
          %237 = sbr.rel (%p235) target = $region24
        $region23: #{tpu_custom_call.1} parent=19 // pred_region
          %p238 = scmp.lt.s32.totalorder %s21, 1
          %s239 = scalar_select %p238, %s21, 1
          %s240 = smul.addr %s239, 4
          %s241 = smul.addr %s240, 4
          %s242 = scalar_lea.vmem %s1, %s241
        $region24: #{tpu_custom_call.1} parent=19 // pred_fallthru
          _
        // Predicated region
        $region25: #{tpu_custom_call.1} parent=19 // pred_check
          %p243 = pneg %p97
        $region26: #{tpu_custom_call.1} parent=19 // pred_check_branch
          %245 = sbr.rel (%p243) target = $region28
        $region27: #{tpu_custom_call.1} parent=19 // pred_region
          %p246 = scmp.lt.s32.totalorder %s21, 1
          %s247 = scalar_select %p246, %s21, 1
          %s248 = smul.addr %s247, 4
          %s249 = smul.addr %s248, 4
          %s250 = scalar_lea.vmem %s2, %s249
        $region28: #{tpu_custom_call.1} parent=19 // pred_fallthru
          _
        // Predicated region
        $region29: #{tpu_custom_call.1} parent=19 // pred_check
          %p251 = pneg %p123
        $region30: #{tpu_custom_call.1} parent=19 // pred_check_branch
          %253 = sbr.rel (%p251) target = $region32
        $region31: #{tpu_custom_call.1} parent=19 // pred_region
          %p254 = scmp.lt.s32.totalorder %s21, 1
          %s255 = scalar_select %p254, %s21, 1
          %s256 = smul.addr %s255, 4
          %s257 = smul.addr %s256, 4
          %s258 = scalar_lea.vmem %s3, %s257
        $region32: #{tpu_custom_call.1} parent=19 // pred_fallthru
          _
        // Predicated region
        $region33: #{tpu_custom_call.1} parent=19 // pred_check
          %p259 = pneg %p149
        $region34: #{tpu_custom_call.1} parent=19 // pred_check_branch
          %261 = sbr.rel (%p259) target = $region36
        $region35: #{tpu_custom_call.1} parent=19 // pred_region
          %p262 = scmp.lt.s32.totalorder %s21, 1
          %s263 = scalar_select %p262, %s21, 1
          %s264 = smul.addr %s263, 16
          %s265 = smul.addr %s264, 4
          %s266 = scalar_lea.vmem %s4, %s265
        $region36: #{tpu_custom_call.1} parent=19 // pred_fallthru
          _
        // Predicated region
        $region37: #{tpu_custom_call.1} parent=19 // pred_check
          %p267 = pneg %p175
        $region38: #{tpu_custom_call.1} parent=19 // pred_check_branch
          %269 = sbr.rel (%p267) target = $region40
        $region39: #{tpu_custom_call.1} parent=19 // pred_region
          %p270 = scmp.lt.s32.totalorder %s21, 1
          %s271 = scalar_select %p270, %s21, 1
          %s272 = smul.addr %s271, 8
          %s273 = scalar_lea.vmem %s5, %s272
        $region40: #{tpu_custom_call.1} parent=19 // pred_fallthru
          _
      $region20: #{tpu_custom_call.1} parent=5 // pred_fallthru
        _
      %p274 = scmp.le.s32.totalorder 1, %s13
      %p275 = scmp.lt.s32.totalorder %s13, 3
      %p276 = pnand %p274, %p275
      %p277 = pneg %p276
      // Predicated region
      $region41: #{tpu_custom_call.1} parent=5 // pred_check
        _
      $region42: #{tpu_custom_call.1} parent=5 // pred_check_branch
        %279 = sbr.rel (%p276) target = $region44
      $region43: #{tpu_custom_call.1} parent=5 // pred_region
        %s280 = ssub.s32 %s13, 1
        %s281 = smul.u32 2, %s22
        %p282 = scmp.lt.s32.totalorder %s281, 1
        %s283 = scalar_select %p282, %s281, 1
        %s284 = smul.addr %s283, 8
        %s285 = scalar_lea.vmem %s0, %s284
        %p286 = pneg %p51
        %p287 = pneg %p48
        %p288 = scmp.lt.s32.totalorder %s23, 1
        %s289 = scalar_select %p288, %s23, 1
        %s290 = smul.addr %s289, 4
        %s291 = smul.addr %s290, 4
        %s292 = scalar_lea.vmem %s1, %s291
        %p293 = pneg %p77
        %p294 = pneg %p74
        %p295 = scmp.lt.s32.totalorder %s23, 1
        %s296 = scalar_select %p295, %s23, 1
        %s297 = smul.addr %s296, 4
        %s298 = smul.addr %s297, 4
        %s299 = scalar_lea.vmem %s2, %s298
        %p300 = pneg %p103
        %p301 = pneg %p100
        %p302 = scmp.lt.s32.totalorder %s23, 1
        %s303 = scalar_select %p302, %s23, 1
        %s304 = smul.addr %s303, 4
        %s305 = smul.addr %s304, 4
        %s306 = scalar_lea.vmem %s3, %s305
        %p307 = pneg %p129
        %p308 = pneg %p126
        %p309 = scmp.lt.s32.totalorder %s23, 1
        %s310 = scalar_select %p309, %s23, 1
        %s311 = smul.addr %s310, 16
        %s312 = smul.addr %s311, 4
        %s313 = scalar_lea.vmem %s4, %s312
        %p314 = pneg %p155
        %p315 = pneg %p152
        %p316 = scmp.lt.s32.totalorder %s23, 1
        %s317 = scalar_select %p316, %s23, 1
        %s318 = smul.addr %s317, 8
        %s319 = scalar_lea.vmem %s5, %s318
        %p320 = pneg %p181
        %p321 = pneg %p178
        %p322 = pneg %p207
        %p323 = pneg %p204
        %s324 = smul.u32 2, %s22
        %p325 = scmp.lt.s32.totalorder %s324, 1
        %s326 = scalar_select %p325, %s324, 1
        %s327 = smul.addr %s326, 8
        %s328 = scalar_lea.vmem %s0, %s327
        %s329 = smul.u32 2, %s22
        %p330 = scmp.lt.s32.totalorder %s23, 1
        %s331 = scalar_select %p330, %s23, 1
        %s332 = smul.addr %s331, 4
        %s333 = smul.addr %s332, 4
        %s334 = scalar_lea.vmem %s1, %s333
        %p335 = scmp.lt.s32.totalorder %s23, 1
        %s336 = scalar_select %p335, %s23, 1
        %s337 = smul.addr %s336, 4
        %s338 = smul.addr %s337, 4
        %s339 = scalar_lea.vmem %s2, %s338
        %p340 = scmp.lt.s32.totalorder %s23, 1
        %s341 = scalar_select %p340, %s23, 1
        %s342 = smul.addr %s341, 4
        %s343 = smul.addr %s342, 4
        %s344 = scalar_lea.vmem %s3, %s343
        %p345 = scmp.lt.s32.totalorder %s23, 1
        %s346 = scalar_select %p345, %s23, 1
        %s347 = smul.addr %s346, 16
        %s348 = smul.addr %s347, 4
        %s349 = scalar_lea.vmem %s4, %s348
        %p350 = scmp.lt.s32.totalorder %s23, 1
        %s351 = scalar_select %p350, %s23, 1
        %s352 = smul.addr %s351, 8
        %s353 = scalar_lea.vmem %s5, %s352
        %s354 = smul.u32 2, %s22
        %p356 = scmp.eq.s32.totalorder %s23, 0
        // Predicated region
        $region45: #{tpu_custom_call.1} parent=43 // pred_check
          %p357 = pneg %p356
        $region46: #{tpu_custom_call.1} parent=43 // pred_check_branch
          %359 = sbr.rel (%p357) target = $region48
        $region47: #{tpu_custom_call.1} parent=43 // pred_region
          %v360 = vld [vmem:[%s328] sm:$0xff]
          %v361 = vld [vmem:[%s328 + $0x8] sm:$0xff]
          %vm362 = vcmask 261120
          %363 = vst.msk [vmem:[#allocation3] sm:$0xff] %vm362, %v360
          %364 = vst.msk [vmem:[#allocation3 + $0x8] sm:$0xff] %vm362, %v361
        $region48: #{tpu_custom_call.1} parent=43 // pred_fallthru
          _
        %v365 = vld [vmem:[#allocation3] sm:$0xff]
        %v366 = vld [vmem:[#allocation3 + $0x8] sm:$0xff]
        %v367 = vld [vmem:[%s353] sm:$0xff]
        %vm368 = vcmask 261120
        %v369 = vsel %vm368, %v365, 0.0
        %370 = vadd.xlane.f32.xlu0 %v369
        %v371 = vpop.xlane.xlu0 %370
        %v372 = vsel %vm368, %v366, 0.0
        %373 = vadd.xlane.f32.xlu0 %v372
        %v374 = vpop.xlane.xlu0 %373
        %v375 = vrcp.pop 32.0
        %v376 = vmul.f32 32.0, %v375
        %v377 = vsub.f32 1.0, %v376
        %v378 = vmul.f32 %v375, %v377
        %v379 = vadd.f32 %v375, %v378
        %vm380 = vweird.f32 %v375
        %v381 = vsel %vm380, %v375, %v379
        %v382 = vmul.f32 %v371, %v381
        %v383 = vmul.f32 %v374, %v381
        %v384 = vsub.f32 %v365, %v382
        %v385 = vsub.f32 %v366, %v383
        %v386 = vmul.f32 %v384, %v384
        %v387 = vmul.f32 %v385, %v385
        %v388 = vsel %vm368, %v386, 0.0
        %389 = vadd.xlane.f32.xlu0 %v388
        %v390 = vpop.xlane.xlu0 %389
        %v391 = vsel %vm368, %v387, 0.0
        %392 = vadd.xlane.f32.xlu0 %v391
        %v393 = vpop.xlane.xlu0 %392
        %v394 = vmul.f32 %v390, %v381
        %v395 = vmul.f32 %v393, %v381
        %v396 = vadd.f32 %v394, 1e-05
        %v397 = vadd.f32 %v395, 1e-05
        %v398 = vrsqrt.pop %v396
        %v399 = vmul.f32 %v398, %v396
        %v400 = vmul.f32 %v399, %v398
        %v401 = vmul.f32 0.5, %v400
        %v402 = vsub.f32 1.5, %v401
        %v403 = vmul.f32 %v398, %v402
        %vm404 = vweird.f32 %v396
        %vm405 = vweird.f32 %v398
        %vm406 = vmor %vm404, %vm405
        %v407 = vsel %vm406, %v398, %v403
        %v408 = vrsqrt.pop %v397
        %v409 = vmul.f32 %v408, %v397
        %v410 = vmul.f32 %v409, %v408
        %v411 = vmul.f32 0.5, %v410
        %v412 = vsub.f32 1.5, %v411
        %v413 = vmul.f32 %v408, %v412
        %vm414 = vweird.f32 %v397
        %vm415 = vweird.f32 %v408
        %vm416 = vmor %vm414, %vm415
        %v417 = vsel %vm416, %v408, %v413
        %v418 = vmul.f32 %v384, %v407
        %v419 = vmul.f32 %v385, %v417
        %v420 = vperm.slane %v367, 4
        %v421 = vmul.f32 %v418, %v420
        %v422 = vmul.f32 %v419, %v420
        %v423 = vperm.slane %v367, 5
        %v424 = vadd.f32 %v421, %v423
        %v425 = vadd.f32 %v422, %v423
        %v426 = vpack.c.bf16 %v425, %v424
        %v427 = vld [vmem:[%s334] sm:$0xf]
        %v428 = vld [vmem:[%s334 + $0x4] sm:$0xf]
        %v429 = vld [vmem:[%s334 + $0x8] sm:$0xf]
        %v430 = vld [vmem:[%s334 + $0xc] sm:$0xf]
        %v431 = vperm.slane %v367, 0
        %v436 = vunpack.c.l.b16 %v427
        %v437 = vunpack.c.l.b16 %v428
        %v438 = vunpack.c.l.b16 %v429
        %v439 = vunpack.c.l.b16 %v430
        %v440 = vpack.c.b16 %v437, %v436
        %v441 = vpack.c.b16 %v439, %v438
        %v445 = vsel %vm368, %v426, 0
        %447 = vmatpush.bf16.msra.mxu0 0
        %448 = vmatpush.bf16.msra.mxu0 0
        %449 = vmatpush.bf16.msra.mxu0 0
        %450 = vmatpush.bf16.msra.mxu0 0
        %451 = vmatpush.bf16.msra.mxu0 0
        %452 = vmatpush.bf16.msra.mxu0 0
        %453 = vmatpush.bf16.msra.mxu0 %v441
        %454 = vmatpush.bf16.msra.mxu0 %v440
        %455 = vmatmul.bf16.gmra.mxu0 %v445
        %v456 = vpop.f32.mrf.mxu0
        %v457 = vadd.f32 %v431, %v456
        %v458 = vpop.f32.mrf.mxu0
        %v459 = vadd.f32 %v431, %v458
        %460 = vdwg.mxu0
        %v461 = vpack.c.bf16 %v457, %v457
        %v462 = vpack.c.bf16 %v459, %v459
        %v463 = vlaneseq
        %v464 = vshrl.u32 %v463, 7
        %v465 = vlaneseq
        %v466 = vand.u32 %v465, 127
        %vm467 = vcmp.gt.s32.totalorder %v466, %v464
        %v469 = vunpack.c.l.b16 %v461
        %v470 = vpack.c.b16 %v469, %v469
        %471 = vrot.lane.b32.xlu0 %v470, 96
        %v472 = vpop.permute.xlu0 %471
        %vm473 = vcmask 64512
        %v475 = vsel %vm473, %v461, 0
        %v478 = vsel %vm473, %v472, 0
        %480 = vmatpush.bf16.xpose.msra.mxu0 0
        %481 = vmatpush.bf16.xpose.msra.mxu0 0
        %482 = vmatpush.bf16.xpose.msra.mxu0 0
        %483 = vmatpush.bf16.xpose.msra.mxu0 0
        %484 = vmatpush.bf16.xpose.msra.mxu0 0
        %485 = vmatpush.bf16.xpose.msra.mxu0 0
        %486 = vmatpush.bf16.xpose.msra.mxu0 0
        %487 = vmatpush.bf16.xpose.msra.mxu0 %v478
        %488 = vmatmul.bf16.gmra.mxu0 %v475
        %v489 = vpop.f32.mrf.mxu0
        %v490 = vadd.f32 0.0, %v489
        %v491 = vpop.f32.mrf.mxu0
        %492 = vdwg.mxu0
        %v494 = vunpack.c.l.b16 %v462
        %v495 = vpack.c.b16 %v494, %v494
        %496 = vrot.lane.b32.xlu0 %v495, 96
        %v497 = vpop.permute.xlu0 %496
        %v499 = vsel %vm473, %v462, 0
        %v502 = vsel %vm473, %v497, 0
        %504 = vmatpush.bf16.xpose.msra.mxu0 0
        %505 = vmatpush.bf16.xpose.msra.mxu0 0
        %506 = vmatpush.bf16.xpose.msra.mxu0 0
        %507 = vmatpush.bf16.xpose.msra.mxu0 0
        %508 = vmatpush.bf16.xpose.msra.mxu0 0
        %509 = vmatpush.bf16.xpose.msra.mxu0 0
        %510 = vmatpush.bf16.xpose.msra.mxu0 0
        %511 = vmatpush.bf16.xpose.msra.mxu0 %v502
        %512 = vmatmul.bf16.gmra.mxu0 %v499
        %v513 = vpop.f32.mrf.mxu0
        %v514 = vadd.f32 0.0, %v513
        %v515 = vpop.f32.mrf.mxu0
        %516 = vdwg.mxu0
        %v517 = vsel %vm467, 1, 0
        %vm518 = vcmp.eq.s32.totalorder %v517, 1
        %v519 = vsel %vm518, -1e+30, %v490
        %v520 = vsel %vm518, -1e+30, %v514
        %v521 = vsel %vm473, %v519, -inf
        %522 = vmax.xlane.f32.xlu0 %v521
        %v523 = vpop.xlane.xlu0 %522
        %v524 = vsel %vm473, %v520, -inf
        %525 = vmax.xlane.f32.xlu0 %v524
        %v526 = vpop.xlane.xlu0 %525
        %v527 = vsub.f32 %v519, %v523
        %v528 = vsub.f32 %v520, %v526
        %v529 = vmul.f32 %v527, 1.442695
        %v530 = vpow.pop %v529
        %v531 = vmul.f32 %v528, 1.442695
        %v532 = vpow.pop %v531
        %v533 = vsel %vm473, %v530, 0.0
        %534 = vadd.xlane.f32.xlu0 %v533
        %v535 = vpop.xlane.xlu0 %534
        %v536 = vsel %vm473, %v532, 0.0
        %537 = vadd.xlane.f32.xlu0 %v536
        %v538 = vpop.xlane.xlu0 %537
        %v539 = vrcp.pop %v535
        %v540 = vrcp.pop %v538
        %v541 = vmul.f32 %v530, %v539
        %v542 = vmul.f32 %v532, %v540
        %v543 = vpack.c.bf16 %v541, %v541
        %v544 = vpack.c.bf16 %v542, %v542
        %545 = vrot.lane.b32.xlu0 %v470, 64
        %v546 = vpop.permute.xlu0 %545
        %v548 = vsel %vm473, %v543, 0
        %vm550 = vcmask 1043456
        %v552 = vsel %vm550, %v546, 0
        %554 = vmatpush.bf16.msra.mxu0 0
        %555 = vmatpush.bf16.msra.mxu0 0
        %556 = vmatpush.bf16.msra.mxu0 0
        %557 = vmatpush.bf16.msra.mxu0 0
        %558 = vmatpush.bf16.msra.mxu0 0
        %559 = vmatpush.bf16.msra.mxu0 0
        %560 = vmatpush.bf16.msra.mxu0 0
        %561 = vmatpush.bf16.msra.mxu0 %v552
        %562 = vmatmul.bf16.gmra.mxu0 %v548
        %v563 = vpop.f32.mrf.mxu0
        %v564 = vadd.f32 0.0, %v563
        %v565 = vpop.f32.mrf.mxu0
        %566 = vdwg.mxu0
        %567 = vrot.lane.b32.xlu0 %v495, 64
        %v568 = vpop.permute.xlu0 %567
        %v570 = vsel %vm473, %v544, 0
        %v573 = vsel %vm550, %v568, 0
        %575 = vmatpush.bf16.msra.mxu0 0
        %576 = vmatpush.bf16.msra.mxu0 0
        %577 = vmatpush.bf16.msra.mxu0 0
        %578 = vmatpush.bf16.msra.mxu0 0
        %579 = vmatpush.bf16.msra.mxu0 0
        %580 = vmatpush.bf16.msra.mxu0 0
        %581 = vmatpush.bf16.msra.mxu0 0
        %582 = vmatpush.bf16.msra.mxu0 %v573
        %583 = vmatmul.bf16.gmra.mxu0 %v570
        %v584 = vpop.f32.mrf.mxu0
        %v585 = vadd.f32 0.0, %v584
        %v586 = vpop.f32.mrf.mxu0
        %587 = vdwg.mxu0
        %v588 = vpack.c.bf16 %v564, %v564
        %v589 = vpack.c.bf16 %v585, %v585
        %vm590 = vcmask 60416
        %591 = vst.msk [vmem:[#allocation2] sm:$0xf] %vm590, %v588
        %592 = vst.msk [vmem:[#allocation2 + $0x4] sm:$0xf] %vm590, %v589
        %593 = vrot.lane.b32.xlu0 %v470, 120
        %v594 = vpop.permute.xlu0 %593
        %595 = vrot.lane.b32.xlu0 %v470, 88
        %v596 = vpop.permute.xlu0 %595
        %v598 = vsel %vm473, %v594, 0
        %v601 = vsel %vm473, %v596, 0
        %603 = vmatpush.bf16.xpose.msra.mxu0 0
        %604 = vmatpush.bf16.xpose.msra.mxu0 0
        %605 = vmatpush.bf16.xpose.msra.mxu0 0
        %606 = vmatpush.bf16.xpose.msra.mxu0 0
        %607 = vmatpush.bf16.xpose.msra.mxu0 0
        %608 = vmatpush.bf16.xpose.msra.mxu0 0
        %609 = vmatpush.bf16.xpose.msra.mxu0 0
        %610 = vmatpush.bf16.xpose.msra.mxu0 %v601
        %611 = vmatmul.bf16.gmra.mxu0 %v598
        %v612 = vpop.f32.mrf.mxu0
        %v613 = vadd.f32 0.0, %v612
        %v614 = vpop.f32.mrf.mxu0
        %615 = vdwg.mxu0
        %616 = vrot.lane.b32.xlu0 %v495, 120
        %v617 = vpop.permute.xlu0 %616
        %618 = vrot.lane.b32.xlu0 %v495, 88
        %v619 = vpop.permute.xlu0 %618
        %v621 = vsel %vm473, %v617, 0
        %v624 = vsel %vm473, %v619, 0
        %626 = vmatpush.bf16.xpose.msra.mxu0 0
        %627 = vmatpush.bf16.xpose.msra.mxu0 0
        %628 = vmatpush.bf16.xpose.msra.mxu0 0
        %629 = vmatpush.bf16.xpose.msra.mxu0 0
        %630 = vmatpush.bf16.xpose.msra.mxu0 0
        %631 = vmatpush.bf16.xpose.msra.mxu0 0
        %632 = vmatpush.bf16.xpose.msra.mxu0 0
        %633 = vmatpush.bf16.xpose.msra.mxu0 %v624
        %634 = vmatmul.bf16.gmra.mxu0 %v621
        %v635 = vpop.f32.mrf.mxu0
        %v636 = vadd.f32 0.0, %v635
        %v637 = vpop.f32.mrf.mxu0
        %638 = vdwg.mxu0
        %v639 = vsel %vm518, -1e+30, %v613
        %v640 = vsel %vm518, -1e+30, %v636
        %v641 = vsel %vm473, %v639, -inf
        %642 = vmax.xlane.f32.xlu0 %v641
        %v643 = vpop.xlane.xlu0 %642
        %v644 = vsel %vm473, %v640, -inf
        %645 = vmax.xlane.f32.xlu0 %v644
        %v646 = vpop.xlane.xlu0 %645
        %v647 = vsub.f32 %v639, %v643
        %v648 = vsub.f32 %v640, %v646
        %v649 = vmul.f32 %v647, 1.442695
        %v650 = vpow.pop %v649
        %v651 = vmul.f32 %v648, 1.442695
        %v652 = vpow.pop %v651
        %v653 = vsel %vm473, %v650, 0.0
        %654 = vadd.xlane.f32.xlu0 %v653
        %v655 = vpop.xlane.xlu0 %654
        %v656 = vsel %vm473, %v652, 0.0
        %657 = vadd.xlane.f32.xlu0 %v656
        %v658 = vpop.xlane.xlu0 %657
        %v659 = vrcp.pop %v655
        %v660 = vrcp.pop %v658
        %v661 = vmul.f32 %v650, %v659
        %v662 = vmul.f32 %v652, %v660
        %v663 = vpack.c.bf16 %v661, %v661
        %v664 = vpack.c.bf16 %v662, %v662
        %665 = vrot.lane.b32.xlu0 %v470, 56
        %v666 = vpop.permute.xlu0 %665
        %v668 = vsel %vm473, %v663, 0
        %v671 = vsel %vm550, %v666, 0
        %673 = vmatpush.bf16.msra.mxu0 0
        %674 = vmatpush.bf16.msra.mxu0 0
        %675 = vmatpush.bf16.msra.mxu0 0
        %676 = vmatpush.bf16.msra.mxu0 0
        %677 = vmatpush.bf16.msra.mxu0 0
        %678 = vmatpush.bf16.msra.mxu0 0
        %679 = vmatpush.bf16.msra.mxu0 0
        %680 = vmatpush.bf16.msra.mxu0 %v671
        %681 = vmatmul.bf16.gmra.mxu0 %v668
        %v682 = vpop.f32.mrf.mxu0
        %v683 = vadd.f32 0.0, %v682
        %v684 = vpop.f32.mrf.mxu0
        %685 = vdwg.mxu0
        %686 = vrot.lane.b32.xlu0 %v495, 56
        %v687 = vpop.permute.xlu0 %686
        %v689 = vsel %vm473, %v664, 0
        %v692 = vsel %vm550, %v687, 0
        %694 = vmatpush.bf16.msra.mxu0 0
        %695 = vmatpush.bf16.msra.mxu0 0
        %696 = vmatpush.bf16.msra.mxu0 0
        %697 = vmatpush.bf16.msra.mxu0 0
        %698 = vmatpush.bf16.msra.mxu0 0
        %699 = vmatpush.bf16.msra.mxu0 0
        %700 = vmatpush.bf16.msra.mxu0 0
        %701 = vmatpush.bf16.msra.mxu0 %v692
        %702 = vmatmul.bf16.gmra.mxu0 %v689
        %v703 = vpop.f32.mrf.mxu0
        %v704 = vadd.f32 0.0, %v703
        %v705 = vpop.f32.mrf.mxu0
        %706 = vdwg.mxu0
        %v707 = vpack.c.bf16 %v683, %v683
        %v708 = vpack.c.bf16 %v704, %v704
        %711 = vrot.lane.b32.xlu0 %v707, 8
        %v712 = vpop.permute.xlu0 %711
        %713 = vrot.lane.b32.xlu0 %v708, 8
        %v714 = vpop.permute.xlu0 %713
        %vm717 = vcmask 126016
        %718 = vst.msk [vmem:[#allocation2] sm:$0xf] %vm717, %v712
        %719 = vst.msk [vmem:[#allocation2 + $0x4] sm:$0xf] %vm717, %v714
        %720 = vrot.lane.b32.xlu0 %v470, 112
        %v721 = vpop.permute.xlu0 %720
        %722 = vrot.lane.b32.xlu0 %v470, 80
        %v723 = vpop.permute.xlu0 %722
        %v725 = vsel %vm473, %v721, 0
        %v728 = vsel %vm473, %v723, 0
        %730 = vmatpush.bf16.xpose.msra.mxu0 0
        %731 = vmatpush.bf16.xpose.msra.mxu0 0
        %732 = vmatpush.bf16.xpose.msra.mxu0 0
        %733 = vmatpush.bf16.xpose.msra.mxu0 0
        %734 = vmatpush.bf16.xpose.msra.mxu0 0
        %735 = vmatpush.bf16.xpose.msra.mxu0 0
        %736 = vmatpush.bf16.xpose.msra.mxu0 0
        %737 = vmatpush.bf16.xpose.msra.mxu0 %v728
        %738 = vmatmul.bf16.gmra.mxu0 %v725
        %v739 = vpop.f32.mrf.mxu0
        %v740 = vadd.f32 0.0, %v739
        %v741 = vpop.f32.mrf.mxu0
        %742 = vdwg.mxu0
        %743 = vrot.lane.b32.xlu0 %v495, 112
        %v744 = vpop.permute.xlu0 %743
        %745 = vrot.lane.b32.xlu0 %v495, 80
        %v746 = vpop.permute.xlu0 %745
        %v748 = vsel %vm473, %v744, 0
        %v751 = vsel %vm473, %v746, 0
        %753 = vmatpush.bf16.xpose.msra.mxu0 0
        %754 = vmatpush.bf16.xpose.msra.mxu0 0
        %755 = vmatpush.bf16.xpose.msra.mxu0 0
        %756 = vmatpush.bf16.xpose.msra.mxu0 0
        %757 = vmatpush.bf16.xpose.msra.mxu0 0
        %758 = vmatpush.bf16.xpose.msra.mxu0 0
        %759 = vmatpush.bf16.xpose.msra.mxu0 0
        %760 = vmatpush.bf16.xpose.msra.mxu0 %v751
        %761 = vmatmul.bf16.gmra.mxu0 %v748
        %v762 = vpop.f32.mrf.mxu0
        %v763 = vadd.f32 0.0, %v762
        %v764 = vpop.f32.mrf.mxu0
        %765 = vdwg.mxu0
        %v766 = vsel %vm518, -1e+30, %v740
        %v767 = vsel %vm518, -1e+30, %v763
        %v768 = vsel %vm473, %v766, -inf
        %769 = vmax.xlane.f32.xlu0 %v768
        %v770 = vpop.xlane.xlu0 %769
        %v771 = vsel %vm473, %v767, -inf
        %772 = vmax.xlane.f32.xlu0 %v771
        %v773 = vpop.xlane.xlu0 %772
        %v774 = vsub.f32 %v766, %v770
        %v775 = vsub.f32 %v767, %v773
        %v776 = vmul.f32 %v774, 1.442695
        %v777 = vpow.pop %v776
        %v778 = vmul.f32 %v775, 1.442695
        %v779 = vpow.pop %v778
        %v780 = vsel %vm473, %v777, 0.0
        %781 = vadd.xlane.f32.xlu0 %v780
        %v782 = vpop.xlane.xlu0 %781
        %v783 = vsel %vm473, %v779, 0.0
        %784 = vadd.xlane.f32.xlu0 %v783
        %v785 = vpop.xlane.xlu0 %784
        %v786 = vrcp.pop %v782
        %v787 = vrcp.pop %v785
        %v788 = vmul.f32 %v777, %v786
        %v789 = vmul.f32 %v779, %v787
        %v790 = vpack.c.bf16 %v788, %v788
        %v791 = vpack.c.bf16 %v789, %v789
        %792 = vrot.lane.b32.xlu0 %v470, 48
        %v793 = vpop.permute.xlu0 %792
        %v795 = vsel %vm473, %v790, 0
        %v798 = vsel %vm550, %v793, 0
        %800 = vmatpush.bf16.msra.mxu0 0
        %801 = vmatpush.bf16.msra.mxu0 0
        %802 = vmatpush.bf16.msra.mxu0 0
        %803 = vmatpush.bf16.msra.mxu0 0
        %804 = vmatpush.bf16.msra.mxu0 0
        %805 = vmatpush.bf16.msra.mxu0 0
        %806 = vmatpush.bf16.msra.mxu0 0
        %807 = vmatpush.bf16.msra.mxu0 %v798
        %808 = vmatmul.bf16.gmra.mxu0 %v795
        %v809 = vpop.f32.mrf.mxu0
        %v810 = vadd.f32 0.0, %v809
        %v811 = vpop.f32.mrf.mxu0
        %812 = vdwg.mxu0
        %813 = vrot.lane.b32.xlu0 %v495, 48
        %v814 = vpop.permute.xlu0 %813
        %v816 = vsel %vm473, %v791, 0
        %v819 = vsel %vm550, %v814, 0
        %821 = vmatpush.bf16.msra.mxu0 0
        %822 = vmatpush.bf16.msra.mxu0 0
        %823 = vmatpush.bf16.msra.mxu0 0
        %824 = vmatpush.bf16.msra.mxu0 0
        %825 = vmatpush.bf16.msra.mxu0 0
        %826 = vmatpush.bf16.msra.mxu0 0
        %827 = vmatpush.bf16.msra.mxu0 0
        %828 = vmatpush.bf16.msra.mxu0 %v819
        %829 = vmatmul.bf16.gmra.mxu0 %v816
        %v830 = vpop.f32.mrf.mxu0
        %v831 = vadd.f32 0.0, %v830
        %v832 = vpop.f32.mrf.mxu0
        %833 = vdwg.mxu0
        %v834 = vpack.c.bf16 %v810, %v810
        %v835 = vpack.c.bf16 %v831, %v831
        %838 = vrot.lane.b32.xlu0 %v834, 16
        %v839 = vpop.permute.xlu0 %838
        %840 = vrot.lane.b32.xlu0 %v835, 16
        %v841 = vpop.permute.xlu0 %840
        %vm844 = vcmask 191616
        %845 = vst.msk [vmem:[#allocation2] sm:$0xf] %vm844, %v839
        %846 = vst.msk [vmem:[#allocation2 + $0x4] sm:$0xf] %vm844, %v841
        %847 = vrot.lane.b32.xlu0 %v470, 104
        %v848 = vpop.permute.xlu0 %847
        %849 = vrot.lane.b32.xlu0 %v470, 72
        %v850 = vpop.permute.xlu0 %849
        %v852 = vsel %vm473, %v848, 0
        %v855 = vsel %vm473, %v850, 0
        %857 = vmatpush.bf16.xpose.msra.mxu0 0
        %858 = vmatpush.bf16.xpose.msra.mxu0 0
        %859 = vmatpush.bf16.xpose.msra.mxu0 0
        %860 = vmatpush.bf16.xpose.msra.mxu0 0
        %861 = vmatpush.bf16.xpose.msra.mxu0 0
        %862 = vmatpush.bf16.xpose.msra.mxu0 0
        %863 = vmatpush.bf16.xpose.msra.mxu0 0
        %864 = vmatpush.bf16.xpose.msra.mxu0 %v855
        %865 = vmatmul.bf16.gmra.mxu0 %v852
        %v866 = vpop.f32.mrf.mxu0
        %v867 = vadd.f32 0.0, %v866
        %v868 = vpop.f32.mrf.mxu0
        %869 = vdwg.mxu0
        %870 = vrot.lane.b32.xlu0 %v495, 104
        %v871 = vpop.permute.xlu0 %870
        %872 = vrot.lane.b32.xlu0 %v495, 72
        %v873 = vpop.permute.xlu0 %872
        %v875 = vsel %vm473, %v871, 0
        %v878 = vsel %vm473, %v873, 0
        %880 = vmatpush.bf16.xpose.msra.mxu0 0
        %881 = vmatpush.bf16.xpose.msra.mxu0 0
        %882 = vmatpush.bf16.xpose.msra.mxu0 0
        %883 = vmatpush.bf16.xpose.msra.mxu0 0
        %884 = vmatpush.bf16.xpose.msra.mxu0 0
        %885 = vmatpush.bf16.xpose.msra.mxu0 0
        %886 = vmatpush.bf16.xpose.msra.mxu0 0
        %887 = vmatpush.bf16.xpose.msra.mxu0 %v878
        %888 = vmatmul.bf16.gmra.mxu0 %v875
        %v889 = vpop.f32.mrf.mxu0
        %v890 = vadd.f32 0.0, %v889
        %v891 = vpop.f32.mrf.mxu0
        %892 = vdwg.mxu0
        %v893 = vsel %vm518, -1e+30, %v867
        %v894 = vsel %vm518, -1e+30, %v890
        %v895 = vsel %vm473, %v893, -inf
        %896 = vmax.xlane.f32.xlu0 %v895
        %v897 = vpop.xlane.xlu0 %896
        %v898 = vsel %vm473, %v894, -inf
        %899 = vmax.xlane.f32.xlu0 %v898
        %v900 = vpop.xlane.xlu0 %899
        %v901 = vsub.f32 %v893, %v897
        %v902 = vsub.f32 %v894, %v900
        %v903 = vmul.f32 %v901, 1.442695
        %v904 = vpow.pop %v903
        %v905 = vmul.f32 %v902, 1.442695
        %v906 = vpow.pop %v905
        %v907 = vsel %vm473, %v904, 0.0
        %908 = vadd.xlane.f32.xlu0 %v907
        %v909 = vpop.xlane.xlu0 %908
        %v910 = vsel %vm473, %v906, 0.0
        %911 = vadd.xlane.f32.xlu0 %v910
        %v912 = vpop.xlane.xlu0 %911
        %v913 = vrcp.pop %v909
        %v914 = vrcp.pop %v912
        %v915 = vmul.f32 %v904, %v913
        %v916 = vmul.f32 %v906, %v914
        %v917 = vpack.c.bf16 %v915, %v915
        %v918 = vpack.c.bf16 %v916, %v916
        %919 = vrot.lane.b32.xlu0 %v470, 40
        %v920 = vpop.permute.xlu0 %919
        %v922 = vsel %vm473, %v917, 0
        %v925 = vsel %vm550, %v920, 0
        %927 = vmatpush.bf16.msra.mxu0 0
        %928 = vmatpush.bf16.msra.mxu0 0
        %929 = vmatpush.bf16.msra.mxu0 0
        %930 = vmatpush.bf16.msra.mxu0 0
        %931 = vmatpush.bf16.msra.mxu0 0
        %932 = vmatpush.bf16.msra.mxu0 0
        %933 = vmatpush.bf16.msra.mxu0 0
        %934 = vmatpush.bf16.msra.mxu0 %v925
        %935 = vmatmul.bf16.gmra.mxu0 %v922
        %v936 = vpop.f32.mrf.mxu0
        %v937 = vadd.f32 0.0, %v936
        %v938 = vpop.f32.mrf.mxu0
        %939 = vdwg.mxu0
        %940 = vrot.lane.b32.xlu0 %v495, 40
        %v941 = vpop.permute.xlu0 %940
        %v943 = vsel %vm473, %v918, 0
        %v946 = vsel %vm550, %v941, 0
        %948 = vmatpush.bf16.msra.mxu0 0
        %949 = vmatpush.bf16.msra.mxu0 0
        %950 = vmatpush.bf16.msra.mxu0 0
        %951 = vmatpush.bf16.msra.mxu0 0
        %952 = vmatpush.bf16.msra.mxu0 0
        %953 = vmatpush.bf16.msra.mxu0 0
        %954 = vmatpush.bf16.msra.mxu0 0
        %955 = vmatpush.bf16.msra.mxu0 %v946
        %956 = vmatmul.bf16.gmra.mxu0 %v943
        %v957 = vpop.f32.mrf.mxu0
        %v958 = vadd.f32 0.0, %v957
        %v959 = vpop.f32.mrf.mxu0
        %960 = vdwg.mxu0
        %v961 = vpack.c.bf16 %v937, %v937
        %v962 = vpack.c.bf16 %v958, %v958
        %965 = vrot.lane.b32.xlu0 %v961, 24
        %v966 = vpop.permute.xlu0 %965
        %967 = vrot.lane.b32.xlu0 %v962, 24
        %v968 = vpop.permute.xlu0 %967
        %vm971 = vcmask 257216
        %972 = vst.msk [vmem:[#allocation2] sm:$0xf] %vm971, %v966
        %973 = vst.msk [vmem:[#allocation2 + $0x4] sm:$0xf] %vm971, %v968
        %v974 = vld [vmem:[#allocation2] sm:$0xf]
        %v975 = vld [vmem:[#allocation2 + $0x4] sm:$0xf]
        %v976 = vld [vmem:[%s339] sm:$0xf]
        %v977 = vld [vmem:[%s339 + $0x4] sm:$0xf]
        %v978 = vld [vmem:[%s339 + $0x8] sm:$0xf]
        %v979 = vld [vmem:[%s339 + $0xc] sm:$0xf]
        %v980 = vperm.slane %v367, 1
        %v983 = vunpack.c.l.b16 %v974
        %v984 = vunpack.c.l.b16 %v975
        %v985 = vpack.c.b16 %v984, %v983
        %v990 = vunpack.c.l.b16 %v976
        %v991 = vunpack.c.l.b16 %v977
        %v992 = vunpack.c.l.b16 %v978
        %v993 = vunpack.c.l.b16 %v979
        %v994 = vpack.c.b16 %v991, %v990
        %v995 = vpack.c.b16 %v993, %v992
        %v999 = vsel %vm368, %v985, 0
        %1001 = vmatpush.bf16.msra.mxu0 0
        %1002 = vmatpush.bf16.msra.mxu0 0
        %1003 = vmatpush.bf16.msra.mxu0 0
        %1004 = vmatpush.bf16.msra.mxu0 0
        %1005 = vmatpush.bf16.msra.mxu0 0
        %1006 = vmatpush.bf16.msra.mxu0 0
        %1007 = vmatpush.bf16.msra.mxu0 %v995
        %1008 = vmatpush.bf16.msra.mxu0 %v994
        %1009 = vmatmul.bf16.gmra.mxu0 %v999
        %v1010 = vpop.f32.mrf.mxu0
        %v1011 = vadd.f32 %v980, %v1010
        %v1012 = vpop.f32.mrf.mxu0
        %v1013 = vadd.f32 %v980, %v1012
        %1014 = vdwg.mxu0
        %v1015 = vadd.f32 %v365, %v1011
        %v1016 = vadd.f32 %v366, %v1013
        %v1017 = vsel %vm368, %v1015, 0.0
        %1018 = vadd.xlane.f32.xlu0 %v1017
        %v1019 = vpop.xlane.xlu0 %1018
        %v1020 = vsel %vm368, %v1016, 0.0
        %1021 = vadd.xlane.f32.xlu0 %v1020
        %v1022 = vpop.xlane.xlu0 %1021
        %v1023 = vmul.f32 %v1019, %v381
        %v1024 = vmul.f32 %v1022, %v381
        %v1025 = vsub.f32 %v1015, %v1023
        %v1026 = vsub.f32 %v1016, %v1024
        %v1027 = vmul.f32 %v1025, %v1025
        %v1028 = vmul.f32 %v1026, %v1026
        %v1029 = vsel %vm368, %v1027, 0.0
        %1030 = vadd.xlane.f32.xlu0 %v1029
        %v1031 = vpop.xlane.xlu0 %1030
        %v1032 = vsel %vm368, %v1028, 0.0
        %1033 = vadd.xlane.f32.xlu0 %v1032
        %v1034 = vpop.xlane.xlu0 %1033
        %v1035 = vmul.f32 %v1031, %v381
        %v1036 = vmul.f32 %v1034, %v381
        %v1037 = vadd.f32 %v1035, 1e-05
        %v1038 = vadd.f32 %v1036, 1e-05
        %v1039 = vrsqrt.pop %v1037
        %v1040 = vmul.f32 %v1039, %v1037
        %v1041 = vmul.f32 %v1040, %v1039
        %v1042 = vmul.f32 0.5, %v1041
        %v1043 = vsub.f32 1.5, %v1042
        %v1044 = vmul.f32 %v1039, %v1043
        %vm1045 = vweird.f32 %v1037
        %vm1046 = vweird.f32 %v1039
        %vm1047 = vmor %vm1045, %vm1046
        %v1048 = vsel %vm1047, %v1039, %v1044
        %v1049 = vrsqrt.pop %v1038
        %v1050 = vmul.f32 %v1049, %v1038
        %v1051 = vmul.f32 %v1050, %v1049
        %v1052 = vmul.f32 0.5, %v1051
        %v1053 = vsub.f32 1.5, %v1052
        %v1054 = vmul.f32 %v1049, %v1053
        %vm1055 = vweird.f32 %v1038
        %vm1056 = vweird.f32 %v1049
        %vm1057 = vmor %vm1055, %vm1056
        %v1058 = vsel %vm1057, %v1049, %v1054
        %v1059 = vmul.f32 %v1025, %v1048
        %v1060 = vmul.f32 %v1026, %v1058
        %v1061 = vperm.slane %v367, 6
        %v1062 = vmul.f32 %v1059, %v1061
        %v1063 = vmul.f32 %v1060, %v1061
        %v1064 = vperm.slane %v367, 7
        %v1065 = vadd.f32 %v1062, %v1064
        %v1066 = vadd.f32 %v1063, %v1064
        %v1067 = vpack.c.bf16 %v1066, %v1065
        %v1068 = vld [vmem:[%s344] sm:$0xf]
        %v1069 = vld [vmem:[%s344 + $0x4] sm:$0xf]
        %v1070 = vld [vmem:[%s344 + $0x8] sm:$0xf]
        %v1071 = vld [vmem:[%s344 + $0xc] sm:$0xf]
        %v1072 = vperm.slane %v367, 2
        %v1077 = vunpack.c.l.b16 %v1068
        %v1078 = vunpack.c.l.b16 %v1069
        %v1079 = vunpack.c.l.b16 %v1070
        %v1080 = vunpack.c.l.b16 %v1071
        %v1081 = vpack.c.b16 %v1078, %v1077
        %v1082 = vpack.c.b16 %v1080, %v1079
        %v1086 = vsel %vm368, %v1067, 0
        %1088 = vmatpush.bf16.msra.mxu0 0
        %1089 = vmatpush.bf16.msra.mxu0 0
        %1090 = vmatpush.bf16.msra.mxu0 0
        %1091 = vmatpush.bf16.msra.mxu0 0
        %1092 = vmatpush.bf16.msra.mxu0 0
        %1093 = vmatpush.bf16.msra.mxu0 0
        %1094 = vmatpush.bf16.msra.mxu0 %v1082
        %1095 = vmatpush.bf16.msra.mxu0 %v1081
        %1096 = vmatmul.bf16.gmra.mxu0 %v1086
        %v1097 = vpop.f32.mrf.mxu0
        %v1098 = vadd.f32 %v1072, %v1097
        %v1099 = vpop.f32.mrf.mxu0
        %v1100 = vadd.f32 %v1072, %v1099
        %1101 = vdwg.mxu0
        %v1102 = vmul.f32 %v1098, %v1098
        %v1103 = vmul.f32 %v1100, %v1100
        %v1104 = vmul.f32 %v1098, %v1102
        %v1105 = vmul.f32 %v1100, %v1103
        %v1106 = vmul.f32 %v1104, 0.044715
        %v1107 = vmul.f32 %v1105, 0.044715
        %v1108 = vadd.f32 %v1098, %v1106
        %v1109 = vadd.f32 %v1100, %v1107
        %v1110 = vmul.f32 %v1108, 0.7978846
        %v1111 = vmul.f32 %v1109, 0.7978846
        %v1112 = vtanh.pop %v1110
        %v1113 = vtanh.pop %v1111
        %v1114 = vadd.f32 %v1112, 1.0
        %v1115 = vadd.f32 %v1113, 1.0
        %v1116 = vmul.f32 %v1114, 0.5
        %v1117 = vmul.f32 %v1115, 0.5
        %v1118 = vmul.f32 %v1098, %v1116
        %v1119 = vmul.f32 %v1100, %v1117
        %v1120 = vpack.c.bf16 %v1119, %v1118
        %v1121 = vld [vmem:[%s349] sm:$0xf]
        %v1122 = vld [vmem:[%s349 + $0x4] sm:$0xf]
        %v1123 = vld [vmem:[%s349 + $0x8] sm:$0xf]
        %v1124 = vld [vmem:[%s349 + $0xc] sm:$0xf]
        %v1125 = vld [vmem:[%s349 + $0x10] sm:$0xf]
        %v1126 = vld [vmem:[%s349 + $0x14] sm:$0xf]
        %v1127 = vld [vmem:[%s349 + $0x18] sm:$0xf]
        %v1128 = vld [vmem:[%s349 + $0x1c] sm:$0xf]
        %v1129 = vld [vmem:[%s349 + $0x20] sm:$0xf]
        %v1130 = vld [vmem:[%s349 + $0x24] sm:$0xf]
        %v1131 = vld [vmem:[%s349 + $0x28] sm:$0xf]
        %v1132 = vld [vmem:[%s349 + $0x2c] sm:$0xf]
        %v1133 = vld [vmem:[%s349 + $0x30] sm:$0xf]
        %v1134 = vld [vmem:[%s349 + $0x34] sm:$0xf]
        %v1135 = vld [vmem:[%s349 + $0x38] sm:$0xf]
        %v1136 = vld [vmem:[%s349 + $0x3c] sm:$0xf]
        %v1137 = vperm.slane %v367, 3
        %v1154 = vunpack.c.l.b16 %v1121
        %v1155 = vunpack.c.l.b16 %v1122
        %v1156 = vunpack.c.l.b16 %v1123
        %v1157 = vunpack.c.l.b16 %v1124
        %v1158 = vunpack.c.l.b16 %v1125
        %v1159 = vunpack.c.l.b16 %v1126
        %v1160 = vunpack.c.l.b16 %v1127
        %v1161 = vunpack.c.l.b16 %v1128
        %v1162 = vunpack.c.l.b16 %v1129
        %v1163 = vunpack.c.l.b16 %v1130
        %v1164 = vunpack.c.l.b16 %v1131
        %v1165 = vunpack.c.l.b16 %v1132
        %v1166 = vunpack.c.l.b16 %v1133
        %v1167 = vunpack.c.l.b16 %v1134
        %v1168 = vunpack.c.l.b16 %v1135
        %v1169 = vunpack.c.l.b16 %v1136
        %v1170 = vpack.c.b16 %v1155, %v1154
        %v1171 = vpack.c.b16 %v1157, %v1156
        %v1172 = vpack.c.b16 %v1159, %v1158
        %v1173 = vpack.c.b16 %v1161, %v1160
        %v1174 = vpack.c.b16 %v1163, %v1162
        %v1175 = vpack.c.b16 %v1165, %v1164
        %v1176 = vpack.c.b16 %v1167, %v1166
        %v1177 = vpack.c.b16 %v1169, %v1168
        %1186 = vmatpush.bf16.msra.mxu0 %v1177
        %1187 = vmatpush.bf16.msra.mxu0 %v1176
        %1188 = vmatpush.bf16.msra.mxu0 %v1175
        %1189 = vmatpush.bf16.msra.mxu0 %v1174
        %1190 = vmatpush.bf16.msra.mxu0 %v1173
        %1191 = vmatpush.bf16.msra.mxu0 %v1172
        %1192 = vmatpush.bf16.msra.mxu0 %v1171
        %1193 = vmatpush.bf16.msra.mxu0 %v1170
        %1194 = vmatmul.bf16.gmra.mxu0 %v1120
        %v1195 = vpop.f32.mrf.mxu0
        %v1196 = vadd.f32 %v1137, %v1195
        %v1197 = vpop.f32.mrf.mxu0
        %v1198 = vadd.f32 %v1137, %v1197
        %1199 = vdwg.mxu0
        %v1200 = vadd.f32 %v1015, %v1196
        %v1201 = vadd.f32 %v1016, %v1198
        %1202 = vst.msk [vmem:[#allocation3] sm:$0xff] %vm368, %v1200
        %1203 = vst.msk [vmem:[#allocation3 + $0x8] sm:$0xff] %vm368, %v1201
        // Predicated region
        $region49: #{tpu_custom_call.1} parent=43 // pred_check
          %p1204 = pneg %p204
        $region50: #{tpu_custom_call.1} parent=43 // pred_check_branch
          %1206 = sbr.rel (%p1204) target = $region52
        $region51: #{tpu_custom_call.1} parent=43 // pred_region
          %s1207 = smul.u32 2, %s22
          %1209 = vsyncadd [#allocation4], 0
          %s1210 = smul.addr %s1207, 8
          %s1211 = scalar_lea.hbm %s6, %s1210
          %s1212 = sshll.u32 [#allocation3], 4
          %s1213 = int_to_ptr.vmem [resolvable:$true] %s1212
          %s1214 = sshll.u32 %s1211, 4
          %s1215 = int_to_ptr.hbm [resolvable:$true] %s1214
          %1220 = dma.vmem_to_hbm [thread:$0]  %s1213, 256, %s1215, [#allocation4], 128, 128, 8
        $region52: #{tpu_custom_call.1} parent=43 // pred_fallthru
          _
        // Predicated region
        $region53: #{tpu_custom_call.1} parent=43 // pred_check
          %p1221 = pneg %p204
        $region54: #{tpu_custom_call.1} parent=43 // pred_check_branch
          %1223 = sbr.rel (%p1221) target = $region56
        $region55: #{tpu_custom_call.1} parent=43 // pred_region
          %1225 = dma.done [#allocation4], 256
        $region56: #{tpu_custom_call.1} parent=43 // pred_fallthru
          _
      $region44: #{tpu_custom_call.1} parent=5 // pred_fallthru
        _
      %p1226 = scmp.le.s32.totalorder 2, %s13
      // Predicated region
      $region57: #{tpu_custom_call.1} parent=5 // pred_check
        %p1227 = pneg %p1226
      $region58: #{tpu_custom_call.1} parent=5 // pred_check_branch
        %1229 = sbr.rel (%p1227) target = $region60
      $region59: #{tpu_custom_call.1} parent=5 // pred_region
        %s1230 = ssub.s32 %s13, 2
      $region60: #{tpu_custom_call.1} parent=5 // pred_fallthru
        _
    $region6: #{tpu_custom_call.1} parent=1 // loop_footer
      %s17 = sadd.s32 1, %s13
    $region7: #{tpu_custom_call.1} parent=1 // loop_footer_branch
      %12 = sbr.rel target = $region3
    $region8: #{tpu_custom_call.1} parent=1 // loop_exit
      _
    %1231 = vsyncpa [#allocation4], 1
    %s1232 = scalar_lea.sflag [#allocation4], 1
    %1233 = vsyncpa %s1232, 1

</llo_original>
